<compile_context>
chip_gen: v6e
topology: v6e:2x2x1
jax: 0.10.0
libtpu: 0.0.40
codegen_flags: <defaults>
</compile_context>

<pallas_src>
import functools

import jax
import jax.numpy as jnp
from jax.experimental import pallas as pl
from jax.experimental.pallas import tpu as pltpu

EPS = 1e-5  # PyTorch nn.LayerNorm default


# --------------------------------------------------------------------------- #
# Math helpers
# --------------------------------------------------------------------------- #
def _layernorm(h, gamma, beta, true_len):
    """One-pass LayerNorm over the last axis, with a true-length divisor so the
    lane dimension may be zero-padded. Padded lanes of gamma/beta are zero, so
    the padded lanes of the output are exactly zero."""
    inv_n = 1.0 / float(true_len)
    s = jnp.sum(h, axis=-1, keepdims=True)
    ss = jnp.sum(h * h, axis=-1, keepdims=True)
    mu = s * inv_n
    var = jnp.maximum(ss * inv_n - mu * mu, 0.0)
    r = jax.lax.rsqrt(var + EPS)
    return (h - mu) * r * gamma + beta


def _layernorm_ref(h, gamma, beta):
    """Module-faithful two-pass centered LayerNorm (reference only)."""
    mu = jnp.mean(h, axis=-1, keepdims=True)
    var = jnp.mean((h - mu) ** 2, axis=-1, keepdims=True)
    return (h - mu) * jax.lax.rsqrt(var + EPS) * gamma + beta


def _round_up(n, m):
    return ((n + m - 1) // m) * m


# --------------------------------------------------------------------------- #
# Hardware probes (cached, safe fallbacks)
# --------------------------------------------------------------------------- #
@functools.lru_cache(maxsize=None)
def _device_kind():
    try:
        return jax.devices()[0].device_kind.lower()
    except Exception:  # pragma: no cover
        return ""


def _cores_per_chip():
    # v7x has 2 TensorCores per chip; v5e/v6e have 1.
    return 2 if "v7" in _device_kind() else 1


def _lane_multiple():
    # v6e/v7x MXUs are 256 wide; 128 suffices on v5e (and is the safe default).
    kind = _device_kind()
    return 256 if ("v6" in kind or "v7" in kind) else 128


def _vmem_limit_bytes(estimate_bytes):
    try:
        cap = int(pltpu.get_tpu_info().vmem_capacity_bytes)
    except Exception:  # pragma: no cover - conservative default (v7x per-TC)
        cap = 64 << 20
    return int(max(32 << 20, min(estimate_bytes + (16 << 20), (cap * 7) // 8)))


def _probe_kernel(x_ref, o_ref):
    o_ref[...] = x_ref[...] + 1.0


@functools.lru_cache(maxsize=None)
def _buffered1_supported():
    """One-time probe: does this JAX/Mosaic build accept pl.Buffered(1) single
    buffering, including for a block whose index varies across the grid?"""
    try:
        f = pl.pallas_call(
            _probe_kernel,
            out_shape=jax.ShapeDtypeStruct((16, 128), jnp.float32),
            grid=(2,),
            in_specs=[pl.BlockSpec((8, 128), lambda i: (i, 0),
                                   pipeline_mode=pl.Buffered(1))],
            out_specs=pl.BlockSpec((8, 128), lambda i: (i, 0)),
        )
        jax.block_until_ready(f(jnp.zeros((16, 128), jnp.float32)))
        return True
    except Exception:
        return False


# --------------------------------------------------------------------------- #
# Tiling heuristics
# --------------------------------------------------------------------------- #
def _pick_batch_tile(bs, ln, hidden_pad, fs_pad):
    """Largest batch tile whose row block (b_tile*ln) stays sublane-aligned and
    within a rough VMEM activation budget. >=2 batch steps are required only on
    multi-TensorCore chips (v7x megacore); on single-TC v5e/v6e the whole batch
    is one tile so the layer weight stack is streamed from HBM exactly once."""
    per_row = hidden_pad * 6 + fs_pad * 8      # h(f32) + hn(bf16) + x(f32, x2 bufs)
    max_rows = max(256, min(1024, (24 << 20) // max(per_row, 1)))
    min_steps = 2 if (_cores_per_chip() >= 2 and bs >= 2) else 1

    candidates = []
    for d in range(1, bs + 1):
        if bs % d:
            continue
        rows = d * ln
        if rows % 8 != 0 and d != bs:
            continue
        if bs // d < min_steps:
            continue
        if rows > max_rows and d != 1:
            continue
        candidates.append(d)
    if not candidates:
        return bs  # full-array block is always layout-legal
    return max(candidates)


def _pick_n_tile(hidden_pad, budget=8 << 20):
    """Largest lane-aligned divisor of hidden_pad whose double-buffered bf16
    weight block (2 * hidden_pad * tn * 2 bytes) stays under `budget`."""
    step = 256 if hidden_pad % 256 == 0 else 128
    best = step
    for tn in range(step, hidden_pad + 1, step):
        if hidden_pad % tn == 0 and 2 * hidden_pad * tn * 2 <= budget:
            best = tn
    return best


# --------------------------------------------------------------------------- #
# Kernel
# --------------------------------------------------------------------------- #
def mlp_kernel(x_ref, g0_ref, b0_ref, w1_ref, bb1_ref,
               rg_ref, rb_ref, rw_ref, rbb_ref,
               gf_ref, bf_ref, wf_ref, bbf_ref,
               out_ref, h_ref, hn_ref, *,
               num_layers, b_tile, seq_len, fs, hidden, n_tile, n_tiles):
    l = pl.program_id(1)
    n = pl.program_id(2)
    n_l = pl.num_programs(1)
    n_n = pl.num_programs(2)

    # ---- input stage: LayerNorm -> (Dropout=id) -> Linear -> ReLU (once per batch tile)
    @pl.when(jnp.logical_and(l == 0, n == 0))
    def _():
        hn = _layernorm(x_ref[...], g0_ref[...], b0_ref[...], fs)
        h = jnp.dot(hn.astype(jnp.bfloat16), w1_ref[...],
                    preferred_element_type=jnp.float32) + bb1_ref[...]
        h_ref[...] = jnp.maximum(h, 0.0)                     # (rows, H_pad) f32

    # ---- one residual block per layer step; weight streamed and N-tiled
    if num_layers > 0:
        # LayerNorm of the running activation is computed once per layer
        # (n == 0) and cached in bf16 so every N-tile reuses it as the matmul
        # operand without recomputing the reduction.
        @pl.when(n == 0)
        def _():
            hn_ref[...] = _layernorm(h_ref[...], rg_ref[0], rb_ref[0],
                                     hidden).astype(jnp.bfloat16)

        hb = jnp.dot(hn_ref[...], rw_ref[0],
                     preferred_element_type=jnp.float32) + rbb_ref[0]
        if n_tiles == 1:
            h_ref[...] = jnp.maximum(hb, 0.0) + h_ref[...]
        else:
            cols = pl.ds(pl.multiple_of(n * n_tile, n_tile), n_tile)
            h_ref[:, cols] = jnp.maximum(hb, 0.0) + h_ref[:, cols]

    # ---- output stage: LayerNorm -> (Dropout=id) -> Linear, seq-mean folded
    @pl.when(jnp.logical_and(l == n_l - 1, n == n_n - 1))
    def _():
        hn = _layernorm(h_ref[...], gf_ref[...], bf_ref[...], hidden)
        # mean over the sequence axis BEFORE the final Linear (exact by linearity)
        m = jnp.mean(hn.reshape(b_tile, seq_len, -1), axis=1)   # (b_tile, H_pad)
        z = jnp.dot(m.astype(jnp.bfloat16), wf_ref[...],
                    preferred_element_type=jnp.float32) + bbf_ref[...]
        out_ref[...] = z[:, None, :]                             # (b_tile, 1, out_pad)


# --------------------------------------------------------------------------- #
# pallas_call builder (cached per shape config) and wrapper
# --------------------------------------------------------------------------- #
@functools.lru_cache(maxsize=None)
def _build_mlp_call(bs, ln, fs, hidden, fs_pad, hidden_pad, out_pad,
                    num_layers, Lp, use_single_buffer):
    b_tile = _pick_batch_tile(bs, ln, hidden_pad, fs_pad)
    n_bt = bs // b_tile
    rows = b_tile * ln

    n_tile = _pick_n_tile(hidden_pad) if num_layers > 0 else hidden_pad
    n_tiles = hidden_pad // n_tile

    def spec(shape, idx, single=False):
        if single and use_single_buffer:
            # Constant / rarely-refetched blocks: one VMEM copy is enough.
            return pl.BlockSpec(shape, idx, pipeline_mode=pl.Buffered(1))
        return pl.BlockSpec(shape, idx)

    c2 = lambda b, l, n: (0, 0)
    in_specs = [
        spec((rows, fs_pad), lambda b, l, n: (b, 0), single=True),        # x rows
        spec((1, fs_pad), c2, single=True),                                # g0
        spec((1, fs_pad), c2, single=True),                                # b0
        spec((fs_pad, hidden_pad), c2, single=True),                       # w1
        spec((1, hidden_pad), c2, single=True),                            # bb1
        pl.BlockSpec((1, 1, hidden_pad), lambda b, l, n: (l, 0, 0)),       # rg   (streamed / layer)
        pl.BlockSpec((1, 1, hidden_pad), lambda b, l, n: (l, 0, 0)),       # rb   (streamed / layer)
        pl.BlockSpec((1, hidden_pad, n_tile), lambda b, l, n: (l, 0, n)),  # rw   (streamed, N-tiled)
        pl.BlockSpec((1, 1, n_tile), lambda b, l, n: (l, 0, n)),           # rbb  (streamed, N-tiled)
        spec((1, hidden_pad), c2, single=True),                            # gf
        spec((1, hidden_pad), c2, single=True),                            # bf
        spec((hidden_pad, out_pad), c2, single=True),                      # wf
        spec((1, out_pad), c2, single=True),                               # bbf
    ]
    out_spec = pl.BlockSpec((b_tile, 1, out_pad), lambda b, l, n: (b, 0, 0))

    kernel = functools.partial(
        mlp_kernel, num_layers=num_layers, b_tile=b_tile, seq_len=ln,
        fs=fs, hidden=hidden, n_tile=n_tile, n_tiles=n_tiles)

    # ---- rough VMEM budget (bytes) ----
    bufs = 1 if use_single_buffer else 2
    resident = ((fs_pad * hidden_pad + hidden_pad * out_pad) * 2
                + (2 * fs_pad + 3 * hidden_pad + out_pad) * 4
                + rows * fs_pad * 4)
    streamed = 2 * (hidden_pad * n_tile * 2 + (2 * hidden_pad + n_tile) * 4)
    scratch = rows * hidden_pad * (4 + 2)
    out_blk = 2 * b_tile * out_pad * 4
    est = bufs * resident + streamed + scratch + out_blk

    # ---- advisory cost estimate for the XLA scheduler ----
    rows_total = bs * ln
    flops = int(2 * rows_total * fs_pad * hidden_pad
                + 2 * rows_total * num_layers * hidden_pad * hidden_pad
                + 2 * bs * hidden_pad * out_pad)
    bytes_accessed = int(rows_total * fs_pad * 4
                         + n_bt * (fs_pad * hidden_pad * 2
                                   + Lp * hidden_pad * hidden_pad * 2
                                   + hidden_pad * out_pad * 2)
                         + bs * out_pad * 4)
    transcendentals = int(rows_total * (num_layers + 2))

    call = pl.pallas_call(
        kernel,
        out_shape=jax.ShapeDtypeStruct((bs, 1, out_pad), jnp.float32),
        grid_spec=pltpu.PrefetchScalarGridSpec(
            num_scalar_prefetch=0,
            grid=(n_bt, Lp, n_tiles),
            in_specs=in_specs,
            out_specs=out_spec,
            scratch_shapes=[pltpu.VMEM((rows, hidden_pad), jnp.float32),
                            pltpu.VMEM((rows, hidden_pad), jnp.bfloat16)]),
        compiler_params=pltpu.CompilerParams(
            dimension_semantics=("parallel", "arbitrary", "arbitrary"),
            vmem_limit_bytes=_vmem_limit_bytes(est)),
        cost_estimate=pl.CostEstimate(flops=flops,
                                      transcendentals=transcendentals,
                                      bytes_accessed=bytes_accessed),
    )
    return jax.jit(call)


def mlp_forward(x, kparams, num_layers, hidden_size, output_size):
    """x: (bs, ln, fs) f32; kparams: padded / device-layout params."""
    bs, ln, fs = x.shape
    fs_pad = kparams["w1"].shape[0]
    hidden_pad = kparams["w1"].shape[1]
    out_pad = kparams["wf"].shape[1]
    Lp = kparams["rw"].shape[0]

    xp = x if fs_pad == fs else jnp.pad(x, ((0, 0), (0, 0), (0, fs_pad - fs)))
    x2 = xp.reshape(bs * ln, fs_pad)   # same reshape the PyTorch forward does

    call = _build_mlp_call(bs, ln, fs, hidden_size, fs_pad, hidden_pad, out_pad,
                           num_layers, Lp, _buffered1_supported())
    out = call(x2,
               kparams["g0"], kparams["b0"], kparams["w1"], kparams["bb1"],
               kparams["rg"], kparams["rb"], kparams["rw"], kparams["rbb"],
               kparams["gf"], kparams["bf"], kparams["wf"], kparams["bbf"])
    return out[:, 0, :output_size]                                  # (bs, out)


# --------------------------------------------------------------------------- #
# Parameters
# --------------------------------------------------------------------------- #
def init_params(key, input_size, hidden_size, output_size, num_layers):
    """Logical (unpadded, f32) params. LayerNorm -> (ones, zeros);
    Linear -> PyTorch-style small uniform."""
    ks = jax.random.split(key, 3)
    Lp = max(num_layers, 1)

    def lin(k, fan_in, fan_out):
        bound = 1.0 / float(fan_in) ** 0.5
        kw, kb = jax.random.split(k)
        w = jax.random.uniform(kw, (fan_in, fan_out), jnp.float32, -bound, bound)
        b = jax.random.uniform(kb, (1, fan_out), jnp.float32, -bound, bound)
        return w, b

    w1, bb1 = lin(ks[0], input_size, hidden_size)
    wf, bbf = lin(ks[1], hidden_size, output_size)
    rkeys = jax.random.split(ks[2], Lp)
    rws, rbs = zip(*(lin(rkeys[i], hidden_size, hidden_size) for i in range(Lp)))

    return {
        "g0": jnp.ones((1, input_size), jnp.float32),
        "b0": jnp.zeros((1, input_size), jnp.float32),
        "w1": w1, "bb1": bb1,
        "rg": jnp.ones((Lp, 1, hidden_size), jnp.float32),
        "rb": jnp.zeros((Lp, 1, hidden_size), jnp.float32),
        "rw": jnp.stack(rws, 0), "rbb": jnp.stack(rbs, 0),
        "gf": jnp.ones((1, hidden_size), jnp.float32),
        "bf": jnp.zeros((1, hidden_size), jnp.float32),
        "wf": wf, "bbf": bbf,
    }


def prepare_params(params, input_size, hidden_size, output_size, lane_mult=None):
    """Pad to lane-dense widths (zeros) and cast matmul weights to bf16.
    Zero padding + masked (true-length) LayerNorm preserves semantics exactly."""
    if lane_mult is None:
        lane_mult = _lane_multiple()
    fs_pad = _round_up(input_size, 128)
    hidden_pad = _round_up(hidden_size, lane_mult)
    out_pad = _round_up(output_size, lane_mult)

    def padlast(a, tgt):
        return jnp.pad(a, [(0, 0)] * (a.ndim - 1) + [(0, tgt - a.shape[-1])])

    def pad2(a, r, c):
        return jnp.pad(a, ((0, r - a.shape[0]), (0, c - a.shape[1])))

    def pad3(a, r, c):
        return jnp.pad(a, ((0, 0), (0, r - a.shape[1]), (0, c - a.shape[2])))

    return {
        "g0": padlast(params["g0"], fs_pad),
        "b0": padlast(params["b0"], fs_pad),
        "w1": pad2(params["w1"], fs_pad, hidden_pad).astype(jnp.bfloat16),
        "bb1": padlast(params["bb1"], hidden_pad),
        "rg": padlast(params["rg"], hidden_pad),
        "rb": padlast(params["rb"], hidden_pad),
        "rw": pad3(params["rw"], hidden_pad, hidden_pad).astype(jnp.bfloat16),
        "rbb": padlast(params["rbb"], hidden_pad),
        "gf": padlast(params["gf"], hidden_pad),
        "bf": padlast(params["bf"], hidden_pad),
        "wf": pad2(params["wf"], hidden_pad, out_pad).astype(jnp.bfloat16),
        "bbf": padlast(params["bbf"], out_pad),
    }


# --------------------------------------------------------------------------- #
# References
# --------------------------------------------------------------------------- #
def mlp_reference(x, params, num_layers, output_size):
    """Module-faithful f32 reference (two-pass LN, f32 matmuls, mean AFTER the
    final Linear, exactly the PyTorch order)."""
    bs, ln, fs = x.shape
    h = x.reshape(-1, fs)
    h = _layernorm_ref(h, params["g0"], params["b0"])
    h = jnp.maximum(h @ params["w1"] + params["bb1"], 0.0)
    for l in range(num_layers):
        hn = _layernorm_ref(h, params["rg"][l], params["rb"][l])
        h = jnp.maximum(hn @ params["rw"][l] + params["rbb"][l], 0.0) + h
    hn = _layernorm_ref(h, params["gf"], params["bf"])
    z = hn @ params["wf"] + params["bbf"]
    return z.reshape(bs, ln, -1).mean(axis=1)[:, :output_size]


def mlp_reference_kernelmath(x, params, num_layers, output_size):
    """Mirror of the kernel's arithmetic: one-pass LN, bf16 matmul operands with
    f32 accumulation, sequence mean folded before the final Linear."""
    bs, ln, fs = x.shape
    f32, bf16 = jnp.float32, jnp.bfloat16
    h = _layernorm(x.reshape(-1, fs), params["g0"], params["b0"], fs)
    h = jnp.maximum(jnp.dot(h.astype(bf16), params["w1"].astype(bf16),
                            preferred_element_type=f32) + params["bb1"], 0.0)
    hidden = params["w1"].shape[1]
    for l in range(num_layers):
        hn = _layernorm(h, params["rg"][l], params["rb"][l], hidden)
        h = jnp.maximum(jnp.dot(hn.astype(bf16), params["rw"][l].astype(bf16),
                                preferred_element_type=f32)
                        + params["rbb"][l], 0.0) + h
    hn = _layernorm(h, params["gf"], params["bf"], hidden)
    m = jnp.mean(hn.reshape(bs, ln, -1), axis=1)
    z = jnp.dot(m.astype(bf16), params["wf"].astype(bf16),
                preferred_element_type=f32) + params["bbf"]
    return z[:, :output_size]


# --------------------------------------------------------------------------- #
if __name__ == "__main__":
    # Small shapes consistent with the module's forward: x is (bs, ln, fs)
    bs, ln, fs = 2, 8, 16
    hidden_size, output_size, num_layers = 32, 4, 2

    key = jax.random.PRNGKey(0)
    kx, kp = jax.random.split(key)
    x = jax.random.normal(kx, (bs, ln, fs), dtype=jnp.float32)

    params = init_params(kp, fs, hidden_size, output_size, num_layers)
    kparams = prepare_params(params, fs, hidden_size, output_size)

    out = mlp_forward(x, kparams, num_layers, hidden_size, output_size)
    out = jax.block_until_ready(out)
    assert out.shape == (bs, output_size), out.shape

    # Tight check vs. a reference that mirrors the kernel's arithmetic exactly.
    ref_exact = mlp_reference_kernelmath(x, params, num_layers, output_size)
    assert jnp.allclose(out, ref_exact, atol=2e-3, rtol=2e-3), (out, ref_exact)

    # Looser check vs. the module-faithful f32 math (bf16 matmul operands and
    # the folded sequence mean change rounding slightly).
    ref_module = mlp_reference(x, params, num_layers, output_size)
    assert jnp.allclose(out, ref_module, atol=3e-2, rtol=3e-2), (out, ref_module)

    print("KERNEL_OK")
</pallas_src>

<mosaic_0001>
module attributes {stable_mosaic.version = 11 : i64} {
  func.func @_probe_kernel(%arg0: i32, %arg1: memref<8x128xf32, #tpu.memory_space<vmem>>, %arg2: memref<8x128xf32, #tpu.memory_space<vmem>>) attributes {dimension_semantics = [#tpu.dimension_semantics<arbitrary>], iteration_bounds = array<i64: 2>, scalar_prefetch = 0 : i64, scratch_operands = 0 : i64, tpu.core_type = #tpu.core_type<tc>, window_params = [{pipeline_mode = #tpu.pipeline_mode<synchronous>, transform_indices = @transform_0, window_bounds = array<i64: 8, 128>}, {transform_indices = @transform_1, window_bounds = array<i64: 8, 128>}]} {
    %c0 = arith.constant 0 : index
    %c0_0 = arith.constant 0 : index
    %0 = vector.load %arg1[%c0, %c0_0] : memref<8x128xf32, #tpu.memory_space<vmem>>, vector<8x128xf32>
    %cst = arith.constant 1.000000e+00 : f32
    %1 = vector.broadcast %cst : f32 to vector<8x128xf32>
    %2 = arith.addf %0, %1 : vector<8x128xf32>
    %c0_1 = arith.constant 0 : index
    %c0_2 = arith.constant 0 : index
    %3 = vector.load %arg2[%c0_1, %c0_2] : memref<8x128xf32, #tpu.memory_space<vmem>>, vector<8x128xf32>
    tpu.vector_store %arg2[%c0_1, %c0_2], %2 {strides = array<i32>} : memref<8x128xf32, #tpu.memory_space<vmem>>, vector<8x128xf32>,
    return
  }
  func.func @transform_0(%arg0: i32) -> (i32, i32) {
    %c0_i32 = arith.constant 0 : i32
    %c0_i32_0 = arith.constant 0 : i32
    return %arg0, %c0_i32 : i32, i32
  }
  func.func @transform_1(%arg0: i32) -> (i32, i32) {
    %c0_i32 = arith.constant 0 : i32
    %c0_i32_0 = arith.constant 0 : i32
    return %arg0, %c0_i32 : i32, i32
  }
}

module attributes {stable_mosaic.version = 11 : i64} {
  func.func @mlp_kernel(%arg0: i32, %arg1: i32, %arg2: i32, %arg3: memref<16x128xf32, #tpu.memory_space<vmem>>, %arg4: memref<1x128xf32, #tpu.memory_space<vmem>>, %arg5: memref<1x128xf32, #tpu.memory_space<vmem>>, %arg6: memref<128x128xbf16, #tpu.memory_space<vmem>>, %arg7: memref<1x128xf32, #tpu.memory_space<vmem>>, %arg8: memref<1x1x128xf32, #tpu.memory_space<vmem>>, %arg9: memref<1x1x128xf32, #tpu.memory_space<vmem>>, %arg10: memref<1x128x128xbf16, #tpu.memory_space<vmem>>, %arg11: memref<1x1x128xf32, #tpu.memory_space<vmem>>, %arg12: memref<1x128xf32, #tpu.memory_space<vmem>>, %arg13: memref<1x128xf32, #tpu.memory_space<vmem>>, %arg14: memref<128x128xbf16, #tpu.memory_space<vmem>>, %arg15: memref<1x128xf32, #tpu.memory_space<vmem>>, %arg16: memref<2x1x128xf32, #tpu.memory_space<vmem>>, %arg17: memref<16x128xf32, #tpu.memory_space<vmem>>, %arg18: memref<16x128xbf16, #tpu.memory_space<vmem>>) attributes {dimension_semantics = [#tpu.dimension_semantics<parallel>, #tpu.dimension_semantics<arbitrary>, #tpu.dimension_semantics<arbitrary>], iteration_bounds = array<i64: 1, 2, 1>, scalar_prefetch = 0 : i64, scratch_operands = 2 : i64, tpu.core_type = #tpu.core_type<tc>, window_params = [{transform_indices = @transform_0, window_bounds = array<i64: 16, 128>}, {pipeline_mode = #tpu.pipeline_mode<synchronous>, transform_indices = @transform_1, window_bounds = array<i64: 1, 128>}, {pipeline_mode = #tpu.pipeline_mode<synchronous>, transform_indices = @transform_2, window_bounds = array<i64: 1, 128>}, {pipeline_mode = #tpu.pipeline_mode<synchronous>, transform_indices = @transform_3, window_bounds = array<i64: 128, 128>}, {pipeline_mode = #tpu.pipeline_mode<synchronous>, transform_indices = @transform_4, window_bounds = array<i64: 1, 128>}, {transform_indices = @transform_5, window_bounds = array<i64: 1, 1, 128>}, {transform_indices = @transform_6, window_bounds = array<i64: 1, 1, 128>}, {transform_indices = @transform_7, window_bounds = array<i64: 1, 128, 128>}, {transform_indices = @transform_8, window_bounds = array<i64: 1, 1, 128>}, {pipeline_mode = #tpu.pipeline_mode<synchronous>, transform_indices = @transform_9, window_bounds = array<i64: 1, 128>}, {pipeline_mode = #tpu.pipeline_mode<synchronous>, transform_indices = @transform_10, window_bounds = array<i64: 1, 128>}, {pipeline_mode = #tpu.pipeline_mode<synchronous>, transform_indices = @transform_11, window_bounds = array<i64: 128, 128>}, {pipeline_mode = #tpu.pipeline_mode<synchronous>, transform_indices = @transform_12, window_bounds = array<i64: 1, 128>}, {transform_indices = @transform_13, window_bounds = array<i64: 2, 1, 128>}]} {
    %c0_i32 = arith.constant 0 : i32
    %0 = arith.cmpi eq, %arg1, %c0_i32 : i32
    %c0_i32_0 = arith.constant 0 : i32
    %1 = arith.cmpi eq, %arg2, %c0_i32_0 : i32
    %2 = arith.andi %0, %1 : i1
    %3 = arith.extui %2 : i1 to i32
    %c0_i32_1 = arith.constant 0 : i32
    %4 = arith.cmpi ne, %3, %c0_i32_1 : i32
    scf.if %4 {
      %c0_18 = arith.constant 0 : index
      %c0_19 = arith.constant 0 : index
      %26 = vector.load %arg3[%c0_18, %c0_19] : memref<16x128xf32, #tpu.memory_space<vmem>>, vector<16x128xf32>
      %c0_20 = arith.constant 0 : index
      %c0_21 = arith.constant 0 : index
      %27 = vector.load %arg4[%c0_20, %c0_21] : memref<1x128xf32, #tpu.memory_space<vmem>>, vector<1x128xf32>
      %c0_22 = arith.constant 0 : index
      %c0_23 = arith.constant 0 : index
      %28 = vector.load %arg5[%c0_22, %c0_23] : memref<1x128xf32, #tpu.memory_space<vmem>>, vector<1x128xf32>
      %cst_24 = arith.constant dense<0.000000e+00> : vector<16xf32>
      %29 = vector.multi_reduction <add>, %26, %cst_24 [1] : vector<16x128xf32> to vector<16xf32>
      %30 = vector.shape_cast %29 : vector<16xf32> to vector<16x1xf32>
      %31 = arith.mulf %26, %26 : vector<16x128xf32>
      %cst_25 = arith.constant dense<0.000000e+00> : vector<16xf32>
      %32 = vector.multi_reduction <add>, %31, %cst_25 [1] : vector<16x128xf32> to vector<16xf32>
      %33 = vector.shape_cast %32 : vector<16xf32> to vector<16x1xf32>
      %cst_26 = arith.constant 6.250000e-02 : f32
      %34 = vector.broadcast %cst_26 : f32 to vector<16x1xf32>
      %35 = arith.mulf %30, %34 : vector<16x1xf32>
      %cst_27 = arith.constant 6.250000e-02 : f32
      %36 = vector.broadcast %cst_27 : f32 to vector<16x1xf32>
      %37 = arith.mulf %33, %36 : vector<16x1xf32>
      %38 = arith.mulf %35, %35 : vector<16x1xf32>
      %39 = arith.subf %37, %38 : vector<16x1xf32>
      %cst_28 = arith.constant 0.000000e+00 : f32
      %40 = vector.broadcast %cst_28 : f32 to vector<16x1xf32>
      %41 = arith.maximumf %39, %40 : vector<16x1xf32>
      %cst_29 = arith.constant 9.99999974E-6 : f32
      %42 = vector.broadcast %cst_29 : f32 to vector<16x1xf32>
      %43 = arith.addf %41, %42 : vector<16x1xf32>
      %44 = math.rsqrt %43 : vector<16x1xf32>
      %45 = vector.broadcast %35 : vector<16x1xf32> to vector<16x128xf32>
      %46 = arith.subf %26, %45 : vector<16x128xf32>
      %47 = vector.broadcast %44 : vector<16x1xf32> to vector<16x128xf32>
      %48 = arith.mulf %46, %47 : vector<16x128xf32>
      %49 = vector.broadcast %27 : vector<1x128xf32> to vector<16x128xf32>
      %50 = arith.mulf %48, %49 : vector<16x128xf32>
      %51 = vector.broadcast %28 : vector<1x128xf32> to vector<16x128xf32>
      %52 = arith.addf %50, %51 : vector<16x128xf32>
      %53 = arith.truncf %52 : vector<16x128xf32> to vector<16x128xbf16>
      %c0_30 = arith.constant 0 : index
      %c0_31 = arith.constant 0 : index
      %54 = vector.load %arg6[%c0_30, %c0_31] : memref<128x128xbf16, #tpu.memory_space<vmem>>, vector<128x128xbf16>
      %cst_32 = arith.constant dense<0.000000e+00> : vector<16x128xf32>
      %55 = tpu.matmul %53, %54, %cst_32 {dimension_numbers = #tpu.dot_dimension_numbers<[1], [0], [0], [1], [0, 0, 1, 1], [], []>} : vector<16x128xbf16>, vector<128x128xbf16>, vector<16x128xf32> -> vector<16x128xf32>
      %c0_33 = arith.constant 0 : index
      %c0_34 = arith.constant 0 : index
      %56 = vector.load %arg7[%c0_33, %c0_34] : memref<1x128xf32, #tpu.memory_space<vmem>>, vector<1x128xf32>
      %57 = vector.broadcast %56 : vector<1x128xf32> to vector<16x128xf32>
      %58 = arith.addf %55, %57 : vector<16x128xf32>
      %cst_35 = arith.constant 0.000000e+00 : f32
      %59 = vector.broadcast %cst_35 : f32 to vector<16x128xf32>
      %60 = arith.maximumf %58, %59 : vector<16x128xf32>
      %c0_36 = arith.constant 0 : index
      %c0_37 = arith.constant 0 : index
      %61 = vector.load %arg17[%c0_36, %c0_37] : memref<16x128xf32, #tpu.memory_space<vmem>>, vector<16x128xf32>
      tpu.vector_store %arg17[%c0_36, %c0_37], %60 {strides = array<i32>} : memref<16x128xf32, #tpu.memory_space<vmem>>, vector<16x128xf32>,
    } else {
    }
    %c0_i32_2 = arith.constant 0 : i32
    %5 = arith.cmpi eq, %arg2, %c0_i32_2 : i32
    %6 = arith.extui %5 : i1 to i32
    %c0_i32_3 = arith.constant 0 : i32
    %7 = arith.cmpi ne, %6, %c0_i32_3 : i32
    scf.if %7 {
      %c0_18 = arith.constant 0 : index
      %c0_19 = arith.constant 0 : index
      %26 = vector.load %arg17[%c0_18, %c0_19] : memref<16x128xf32, #tpu.memory_space<vmem>>, vector<16x128xf32>
      %c0_20 = arith.constant 0 : index
      %c0_21 = arith.constant 0 : index
      %c0_22 = arith.constant 0 : index
      %27 = vector.load %arg8[%c0_20, %c0_21, %c0_22] : memref<1x1x128xf32, #tpu.memory_space<vmem>>, vector<1x1x128xf32>
      %28 = vector.shape_cast %27 : vector<1x1x128xf32> to vector<1x128xf32>
      %c0_23 = arith.constant 0 : index
      %c0_24 = arith.constant 0 : index
      %c0_25 = arith.constant 0 : index
      %29 = vector.load %arg9[%c0_23, %c0_24, %c0_25] : memref<1x1x128xf32, #tpu.memory_space<vmem>>, vector<1x1x128xf32>
      %30 = vector.shape_cast %29 : vector<1x1x128xf32> to vector<1x128xf32>
      %cst_26 = arith.constant dense<0.000000e+00> : vector<16xf32>
      %31 = vector.multi_reduction <add>, %26, %cst_26 [1] : vector<16x128xf32> to vector<16xf32>
      %32 = vector.shape_cast %31 : vector<16xf32> to vector<16x1xf32>
      %33 = arith.mulf %26, %26 : vector<16x128xf32>
      %cst_27 = arith.constant dense<0.000000e+00> : vector<16xf32>
      %34 = vector.multi_reduction <add>, %33, %cst_27 [1] : vector<16x128xf32> to vector<16xf32>
      %35 = vector.shape_cast %34 : vector<16xf32> to vector<16x1xf32>
      %cst_28 = arith.constant 3.125000e-02 : f32
      %36 = vector.broadcast %cst_28 : f32 to vector<16x1xf32>
      %37 = arith.mulf %32, %36 : vector<16x1xf32>
      %cst_29 = arith.constant 3.125000e-02 : f32
      %38 = vector.broadcast %cst_29 : f32 to vector<16x1xf32>
      %39 = arith.mulf %35, %38 : vector<16x1xf32>
      %40 = arith.mulf %37, %37 : vector<16x1xf32>
      %41 = arith.subf %39, %40 : vector<16x1xf32>
      %cst_30 = arith.constant 0.000000e+00 : f32
      %42 = vector.broadcast %cst_30 : f32 to vector<16x1xf32>
      %43 = arith.maximumf %41, %42 : vector<16x1xf32>
      %cst_31 = arith.constant 9.99999974E-6 : f32
      %44 = vector.broadcast %cst_31 : f32 to vector<16x1xf32>
      %45 = arith.addf %43, %44 : vector<16x1xf32>
      %46 = math.rsqrt %45 : vector<16x1xf32>
      %47 = vector.broadcast %37 : vector<16x1xf32> to vector<16x128xf32>
      %48 = arith.subf %26, %47 : vector<16x128xf32>
      %49 = vector.broadcast %46 : vector<16x1xf32> to vector<16x128xf32>
      %50 = arith.mulf %48, %49 : vector<16x128xf32>
      %51 = vector.broadcast %28 : vector<1x128xf32> to vector<16x128xf32>
      %52 = arith.mulf %50, %51 : vector<16x128xf32>
      %53 = vector.broadcast %30 : vector<1x128xf32> to vector<16x128xf32>
      %54 = arith.addf %52, %53 : vector<16x128xf32>
      %55 = arith.truncf %54 : vector<16x128xf32> to vector<16x128xbf16>
      %c0_32 = arith.constant 0 : index
      %c0_33 = arith.constant 0 : index
      %56 = vector.load %arg18[%c0_32, %c0_33] : memref<16x128xbf16, #tpu.memory_space<vmem>>, vector<16x128xbf16>
      tpu.vector_store %arg18[%c0_32, %c0_33], %55 {strides = array<i32>} : memref<16x128xbf16, #tpu.memory_space<vmem>>, vector<16x128xbf16>,
    } else {
    }
    %c0 = arith.constant 0 : index
    %c0_4 = arith.constant 0 : index
    %8 = vector.load %arg18[%c0, %c0_4] : memref<16x128xbf16, #tpu.memory_space<vmem>>, vector<16x128xbf16>
    %c0_5 = arith.constant 0 : index
    %c0_6 = arith.constant 0 : index
    %c0_7 = arith.constant 0 : index
    %9 = vector.load %arg10[%c0_5, %c0_6, %c0_7] : memref<1x128x128xbf16, #tpu.memory_space<vmem>>, vector<1x128x128xbf16>
    %10 = vector.shape_cast %9 : vector<1x128x128xbf16> to vector<128x128xbf16>
    %cst = arith.constant dense<0.000000e+00> : vector<16x128xf32>
    %11 = tpu.matmul %8, %10, %cst {dimension_numbers = #tpu.dot_dimension_numbers<[1], [0], [0], [1], [0, 0, 1, 1], [], []>} : vector<16x128xbf16>, vector<128x128xbf16>, vector<16x128xf32> -> vector<16x128xf32>
    %c0_8 = arith.constant 0 : index
    %c0_9 = arith.constant 0 : index
    %c0_10 = arith.constant 0 : index
    %12 = vector.load %arg11[%c0_8, %c0_9, %c0_10] : memref<1x1x128xf32, #tpu.memory_space<vmem>>, vector<1x1x128xf32>
    %13 = vector.shape_cast %12 : vector<1x1x128xf32> to vector<1x128xf32>
    %14 = vector.broadcast %13 : vector<1x128xf32> to vector<16x128xf32>
    %15 = arith.addf %11, %14 : vector<16x128xf32>
    %cst_11 = arith.constant 0.000000e+00 : f32
    %16 = vector.broadcast %cst_11 : f32 to vector<16x128xf32>
    %17 = arith.maximumf %15, %16 : vector<16x128xf32>
    %c0_12 = arith.constant 0 : index
    %c0_13 = arith.constant 0 : index
    %18 = vector.load %arg17[%c0_12, %c0_13] : memref<16x128xf32, #tpu.memory_space<vmem>>, vector<16x128xf32>
    %19 = arith.addf %17, %18 : vector<16x128xf32>
    %c0_14 = arith.constant 0 : index
    %c0_15 = arith.constant 0 : index
    %20 = vector.load %arg17[%c0_14, %c0_15] : memref<16x128xf32, #tpu.memory_space<vmem>>, vector<16x128xf32>
    tpu.vector_store %arg17[%c0_14, %c0_15], %19 {strides = array<i32>} : memref<16x128xf32, #tpu.memory_space<vmem>>, vector<16x128xf32>,
    %c1_i32 = arith.constant 1 : i32
    %21 = arith.cmpi eq, %arg1, %c1_i32 : i32
    %c0_i32_16 = arith.constant 0 : i32
    %22 = arith.cmpi eq, %arg2, %c0_i32_16 : i32
    %23 = arith.andi %21, %22 : i1
    %24 = arith.extui %23 : i1 to i32
    %c0_i32_17 = arith.constant 0 : i32
    %25 = arith.cmpi ne, %24, %c0_i32_17 : i32
    scf.if %25 {
      %c0_18 = arith.constant 0 : index
      %c0_19 = arith.constant 0 : index
      %26 = vector.load %arg17[%c0_18, %c0_19] : memref<16x128xf32, #tpu.memory_space<vmem>>, vector<16x128xf32>
      %c0_20 = arith.constant 0 : index
      %c0_21 = arith.constant 0 : index
      %27 = vector.load %arg12[%c0_20, %c0_21] : memref<1x128xf32, #tpu.memory_space<vmem>>, vector<1x128xf32>
      %c0_22 = arith.constant 0 : index
      %c0_23 = arith.constant 0 : index
      %28 = vector.load %arg13[%c0_22, %c0_23] : memref<1x128xf32, #tpu.memory_space<vmem>>, vector<1x128xf32>
      %cst_24 = arith.constant dense<0.000000e+00> : vector<16xf32>
      %29 = vector.multi_reduction <add>, %26, %cst_24 [1] : vector<16x128xf32> to vector<16xf32>
      %30 = vector.shape_cast %29 : vector<16xf32> to vector<16x1xf32>
      %31 = arith.mulf %26, %26 : vector<16x128xf32>
      %cst_25 = arith.constant dense<0.000000e+00> : vector<16xf32>
      %32 = vector.multi_reduction <add>, %31, %cst_25 [1] : vector<16x128xf32> to vector<16xf32>
      %33 = vector.shape_cast %32 : vector<16xf32> to vector<16x1xf32>
      %cst_26 = arith.constant 3.125000e-02 : f32
      %34 = vector.broadcast %cst_26 : f32 to vector<16x1xf32>
      %35 = arith.mulf %30, %34 : vector<16x1xf32>
      %cst_27 = arith.constant 3.125000e-02 : f32
      %36 = vector.broadcast %cst_27 : f32 to vector<16x1xf32>
      %37 = arith.mulf %33, %36 : vector<16x1xf32>
      %38 = arith.mulf %35, %35 : vector<16x1xf32>
      %39 = arith.subf %37, %38 : vector<16x1xf32>
      %cst_28 = arith.constant 0.000000e+00 : f32
      %40 = vector.broadcast %cst_28 : f32 to vector<16x1xf32>
      %41 = arith.maximumf %39, %40 : vector<16x1xf32>
      %cst_29 = arith.constant 9.99999974E-6 : f32
      %42 = vector.broadcast %cst_29 : f32 to vector<16x1xf32>
      %43 = arith.addf %41, %42 : vector<16x1xf32>
      %44 = math.rsqrt %43 : vector<16x1xf32>
      %45 = vector.broadcast %35 : vector<16x1xf32> to vector<16x128xf32>
      %46 = arith.subf %26, %45 : vector<16x128xf32>
      %47 = vector.broadcast %44 : vector<16x1xf32> to vector<16x128xf32>
      %48 = arith.mulf %46, %47 : vector<16x128xf32>
      %49 = vector.broadcast %27 : vector<1x128xf32> to vector<16x128xf32>
      %50 = arith.mulf %48, %49 : vector<16x128xf32>
      %51 = vector.broadcast %28 : vector<1x128xf32> to vector<16x128xf32>
      %52 = arith.addf %50, %51 : vector<16x128xf32>
      %53 = vector.shape_cast %52 : vector<16x128xf32> to vector<2x8x128xf32>
      %cst_30 = arith.constant dense<0.000000e+00> : vector<2x128xf32>
      %54 = vector.multi_reduction <add>, %53, %cst_30 [1] : vector<2x8x128xf32> to vector<2x128xf32>
      %cst_31 = arith.constant 8.000000e+00 : f32
      %55 = vector.broadcast %cst_31 : f32 to vector<2x128xf32>
      %56 = arith.divf %54, %55 : vector<2x128xf32>
      %57 = arith.truncf %56 : vector<2x128xf32> to vector<2x128xbf16>
      %c0_32 = arith.constant 0 : index
      %c0_33 = arith.constant 0 : index
      %58 = vector.load %arg14[%c0_32, %c0_33] : memref<128x128xbf16, #tpu.memory_space<vmem>>, vector<128x128xbf16>
      %cst_34 = arith.constant dense<0.000000e+00> : vector<2x128xf32>
      %59 = tpu.matmul %57, %58, %cst_34 {dimension_numbers = #tpu.dot_dimension_numbers<[1], [0], [0], [1], [0, 0, 1, 1], [], []>} : vector<2x128xbf16>, vector<128x128xbf16>, vector<2x128xf32> -> vector<2x128xf32>
      %c0_35 = arith.constant 0 : index
      %c0_36 = arith.constant 0 : index
      %60 = vector.load %arg15[%c0_35, %c0_36] : memref<1x128xf32, #tpu.memory_space<vmem>>, vector<1x128xf32>
      %61 = vector.broadcast %60 : vector<1x128xf32> to vector<2x128xf32>
      %62 = arith.addf %59, %61 : vector<2x128xf32>
      %63 = vector.shape_cast %62 : vector<2x128xf32> to vector<2x1x128xf32>
      %c0_37 = arith.constant 0 : index
      %c0_38 = arith.constant 0 : index
      %c0_39 = arith.constant 0 : index
      %64 = vector.load %arg16[%c0_37, %c0_38, %c0_39] : memref<2x1x128xf32, #tpu.memory_space<vmem>>, vector<2x1x128xf32>
      tpu.vector_store %arg16[%c0_37, %c0_38, %c0_39], %63 {strides = array<i32>} : memref<2x1x128xf32, #tpu.memory_space<vmem>>, vector<2x1x128xf32>,
    } else {
    }
    return
  }
  func.func @transform_0(%arg0: i32, %arg1: i32, %arg2: i32) -> (i32, i32) {
    %c0_i32 = arith.constant 0 : i32
    %c0_i32_0 = arith.constant 0 : i32
    return %arg0, %c0_i32 : i32, i32
  }
  func.func @transform_1(%arg0: i32, %arg1: i32, %arg2: i32) -> (i32, i32) {
    %c0_i32 = arith.constant 0 : i32
    %c0_i32_0 = arith.constant 0 : i32
    %c0_i32_1 = arith.constant 0 : i32
    return %c0_i32, %c0_i32_0 : i32, i32
  }
  func.func @transform_2(%arg0: i32, %arg1: i32, %arg2: i32) -> (i32, i32) {
    %c0_i32 = arith.constant 0 : i32
    %c0_i32_0 = arith.constant 0 : i32
    %c0_i32_1 = arith.constant 0 : i32
    return %c0_i32, %c0_i32_0 : i32, i32
  }
  func.func @transform_3(%arg0: i32, %arg1: i32, %arg2: i32) -> (i32, i32) {
    %c0_i32 = arith.constant 0 : i32
    %c0_i32_0 = arith.constant 0 : i32
    %c0_i32_1 = arith.constant 0 : i32
    return %c0_i32, %c0_i32_0 : i32, i32
  }
  func.func @transform_4(%arg0: i32, %arg1: i32, %arg2: i32) -> (i32, i32) {
    %c0_i32 = arith.constant 0 : i32
    %c0_i32_0 = arith.constant 0 : i32
    %c0_i32_1 = arith.constant 0 : i32
    return %c0_i32, %c0_i32_0 : i32, i32
  }
  func.func @transform_5(%arg0: i32, %arg1: i32, %arg2: i32) -> (i32, i32, i32) {
    %c0_i32 = arith.constant 0 : i32
    %c0_i32_0 = arith.constant 0 : i32
    %c0_i32_1 = arith.constant 0 : i32
    return %arg1, %c0_i32, %c0_i32_0 : i32, i32, i32
  }
  func.func @transform_6(%arg0: i32, %arg1: i32, %arg2: i32) -> (i32, i32, i32) {
    %c0_i32 = arith.constant 0 : i32
    %c0_i32_0 = arith.constant 0 : i32
    %c0_i32_1 = arith.constant 0 : i32
    return %arg1, %c0_i32, %c0_i32_0 : i32, i32, i32
  }
  func.func @transform_7(%arg0: i32, %arg1: i32, %arg2: i32) -> (i32, i32, i32) {
    %c0_i32 = arith.constant 0 : i32
    %c0_i32_0 = arith.constant 0 : i32
    return %arg1, %c0_i32, %arg2 : i32, i32, i32
  }
  func.func @transform_8(%arg0: i32, %arg1: i32, %arg2: i32) -> (i32, i32, i32) {
    %c0_i32 = arith.constant 0 : i32
    %c0_i32_0 = arith.constant 0 : i32
    return %arg1, %c0_i32, %arg2 : i32, i32, i32
  }
  func.func @transform_9(%arg0: i32, %arg1: i32, %arg2: i32) -> (i32, i32) {
    %c0_i32 = arith.constant 0 : i32
    %c0_i32_0 = arith.constant 0 : i32
    %c0_i32_1 = arith.constant 0 : i32
    return %c0_i32, %c0_i32_0 : i32, i32
  }
  func.func @transform_10(%arg0: i32, %arg1: i32, %arg2: i32) -> (i32, i32) {
    %c0_i32 = arith.constant 0 : i32
    %c0_i32_0 = arith.constant 0 : i32
    %c0_i32_1 = arith.constant 0 : i32
    return %c0_i32, %c0_i32_0 : i32, i32
  }
  func.func @transform_11(%arg0: i32, %arg1: i32, %arg2: i32) -> (i32, i32) {
    %c0_i32 = arith.constant 0 : i32
    %c0_i32_0 = arith.constant 0 : i32
    %c0_i32_1 = arith.constant 0 : i32
    return %c0_i32, %c0_i32_0 : i32, i32
  }
  func.func @transform_12(%arg0: i32, %arg1: i32, %arg2: i32) -> (i32, i32) {
    %c0_i32 = arith.constant 0 : i32
    %c0_i32_0 = arith.constant 0 : i32
    %c0_i32_1 = arith.constant 0 : i32
    return %c0_i32, %c0_i32_0 : i32, i32
  }
  func.func @transform_13(%arg0: i32, %arg1: i32, %arg2: i32) -> (i32, i32, i32) {
    %c0_i32 = arith.constant 0 : i32
    %c0_i32_0 = arith.constant 0 : i32
    %c0_i32_1 = arith.constant 0 : i32
    return %arg0, %c0_i32, %c0_i32_0 : i32, i32, i32
  }
}

</mosaic_0001>

<llo_original>
// kernel: tpu_custom_call.1
$region0: #{tpu_custom_call.1}
  #allocation0 [shape = 'u32[]', space=smem, size = 0x4, offset = 0x4, fixed_abs, tag = 'smem constant byte address 0x4 - core index']
  #allocation1 [shape = 'u32[144,128]{1,0:T(1,128)}', space=vmem, size = 0x12000, scoped, tag = 'internal scratch']
  %s0 = inlined_call_operand.hbm [shape: f32[16,128], index: 0, kind: input, shape index: {}]
  %s1 = inlined_call_operand.hbm [shape: f32[16,128], index: 1, kind: output, shape index: {}]
  %s2 = sld [smem:[#allocation0]]
  $region41: #{tpu_custom_call.1} parent=0
    _
  %s4 = ssub.s32 1, %s2
  %s5 = scalar_select 0, %s4, %s2
  $region1: #{tpu_custom_call.1} parent=0
    #allocation2 [shape = 'u8[4096]{0}', space=vmem, size = 0x1000, scoped, tag = 'input window, operand 0, single buffered']
    #allocation3 [shape = 's32[2]{0}', space=sflag, size = 0x8, scoped, tag = 'scoped memory for tpu_custom_call.1']
    #allocation4 [shape = 's32[2]{0}', space=sflag, size = 0x8, scoped, tag = 'scoped memory for tpu_custom_call.1']
    #allocation5 [shape = 'u8[8192]{0}', space=vmem, size = 0x2000, scoped, tag = 'output window, operand 0']
    %6 = vsyncpa [#allocation3], 0
    %7 = vsyncpa [#allocation4], 0
    %s8 = scalar_lea.sflag [#allocation4], 1
    %9 = vsyncpa %s8, 0
    loop: start=0, step=1, limit=4
    $region2: #{tpu_custom_call.1} parent=1 // loop_pre_header
      _
    $region3: #{tpu_custom_call.1} parent=1 // loop_header
      %s11 = sphi 0, %s15
      %p12 = scmp.ge.s32.totalorder %s11, 4
      %s21 = sphi 0, %s23
      %s24 = sphi 0, %s21
      %s25 = sphi 0, %s24
      %s41 = sphi 0, %s25
      %s47 = sphi 0, %s49
      %s50 = sphi 0, %s47
      %s51 = sphi 0, %s50
      %s67 = sphi 0, %s51
    $region4: #{tpu_custom_call.1} parent=1 // loop_header_branch
      %14 = sbr.rel (%p12) target = $region8
    $region5: #{tpu_custom_call.1} parent=1 // loop_body
      %s16 = ssub.s32 %s11, 1
      %s17 = ssub.s32 %s11, 2
      %s18 = sadd.s32 %s11, 1
      %s19 = ssub.s32 %s11, %s18
      %p20 = scmp.eq.s32.totalorder %s19, 0
      %s22 = sadd.s32 %s21, 1
      %s23 = scalar_select %p20, %s21, %s22
      %p26 = pneg %p20
      %p27 = scmp.eq.s32.totalorder %s11, 1
      %p28 = por %p26, %p27
      %p29 = scmp.ne.s32.totalorder %s21, %s24
      %p30 = scmp.eq.s32.totalorder %s11, 0
      %p31 = por %p29, %p30
      %p32 = scmp.ne.s32.totalorder %s21, %s24
      %p33 = scmp.eq.s32.totalorder %s16, 1
      %p34 = por %p32, %p33
      %p35 = scmp.ne.s32.totalorder %s24, %s25
      %p36 = scmp.eq.s32.totalorder %s16, 0
      %p37 = por %p35, %p36
      %p38 = scmp.ne.s32.totalorder %s24, %s25
      %p39 = scmp.eq.s32.totalorder %s17, 1
      %p40 = por %p38, %p39
      %p42 = scmp.ne.s32.totalorder %s25, %s41
      %p43 = scmp.eq.s32.totalorder %s17, 0
      %p44 = por %p42, %p43
      %s45 = ssub.s32 %s11, %s18
      %p46 = scmp.eq.s32.totalorder %s45, 0
      %s48 = sadd.s32 %s47, 1
      %s49 = scalar_select %p46, %s47, %s48
      %p52 = pneg %p46
      %p53 = scmp.eq.s32.totalorder %s11, 1
      %p54 = por %p52, %p53
      %p55 = scmp.ne.s32.totalorder %s47, %s50
      %p56 = scmp.eq.s32.totalorder %s11, 0
      %p57 = por %p55, %p56
      %p58 = scmp.ne.s32.totalorder %s47, %s50
      %p59 = scmp.eq.s32.totalorder %s16, 1
      %p60 = por %p58, %p59
      %p61 = scmp.ne.s32.totalorder %s50, %s51
      %p62 = scmp.eq.s32.totalorder %s16, 0
      %p63 = por %p61, %p62
      %p64 = scmp.ne.s32.totalorder %s50, %s51
      %p65 = scmp.eq.s32.totalorder %s17, 1
      %p66 = por %p64, %p65
      %p68 = scmp.ne.s32.totalorder %s51, %s67
      %p69 = scmp.eq.s32.totalorder %s17, 0
      %p70 = por %p68, %p69
      %p71 = scmp.le.s32.totalorder 1, %s11
      %p72 = scmp.lt.s32.totalorder %s11, 3
      %p73 = pnand %p71, %p72
      %p74 = pneg %p73
      // Predicated region
      $region9: #{tpu_custom_call.1} parent=5 // pred_check
        _
      $region10: #{tpu_custom_call.1} parent=5 // pred_check_branch
        %76 = sbr.rel (%p73) target = $region12
      $region11: #{tpu_custom_call.1} parent=5 // pred_region
        %s77 = ssub.s32 %s11, 1
        // Predicated region
        $region13: #{tpu_custom_call.1} parent=11 // pred_check
          %p78 = pneg %p37
        $region14: #{tpu_custom_call.1} parent=11 // pred_check_branch
          %80 = sbr.rel (%p78) target = $region16
        $region15: #{tpu_custom_call.1} parent=11 // pred_region
          %s82 = ssub.s32 128, 128
          %83 = vsyncadd [#allocation3], %s82
          %s84 = smul.addr %s16, 128
          %s85 = scalar_lea.hbm %s0, %s84
          %s87 = sshll.u32 [#allocation2], 4
          %s88 = int_to_ptr.vmem [resolvable:$true] %s87
          %90 = dma.hbm_to_vmem [thread:$0]  %s85, 128, %s88, [#allocation3]
        $region16: #{tpu_custom_call.1} parent=11 // pred_fallthru
          _
      $region12: #{tpu_custom_call.1} parent=5 // pred_fallthru
        _
      %p91 = scmp.lt.s32.totalorder %s11, 2
      // Predicated region
      $region17: #{tpu_custom_call.1} parent=5 // pred_check
        %p92 = pneg %p91
      $region18: #{tpu_custom_call.1} parent=5 // pred_check_branch
        %94 = sbr.rel (%p92) target = $region20
      $region19: #{tpu_custom_call.1} parent=5 // pred_region
        _
      $region20: #{tpu_custom_call.1} parent=5 // pred_fallthru
        _
      %p95 = scmp.le.s32.totalorder 1, %s11
      %p96 = scmp.lt.s32.totalorder %s11, 3
      %p97 = pnand %p95, %p96
      %p98 = pneg %p97
      // Predicated region
      $region21: #{tpu_custom_call.1} parent=5 // pred_check
        _
      $region22: #{tpu_custom_call.1} parent=5 // pred_check_branch
        %100 = sbr.rel (%p97) target = $region24
      $region23: #{tpu_custom_call.1} parent=5 // pred_region
        %s101 = ssub.s32 %s11, 1
        // Predicated region
        $region25: #{tpu_custom_call.1} parent=23 // pred_check
          %p102 = pneg %p37
        $region26: #{tpu_custom_call.1} parent=23 // pred_check_branch
          %104 = sbr.rel (%p102) target = $region28
        $region27: #{tpu_custom_call.1} parent=23 // pred_region
          %105 = dma.done [#allocation3], 128
        $region28: #{tpu_custom_call.1} parent=23 // pred_fallthru
          _
        %p106 = pneg %p37
        %p107 = pneg %p34
        %p108 = pneg %p63
        %p109 = pneg %p60
        %s110 = sand.u32 %s50, 1
        %s111 = scalar_lea.sflag [#allocation4], %s110
        %s112 = sand.u32 %s50, 1
        %s113 = smul.addr %s112, 8
        %s114 = scalar_lea.vmem [#allocation5], %s113
        %v115 = vld [vmem:[#allocation2] sm:$0xff]
        %v116 = vadd.f32 %v115, 1.0
        %117 = vst [vmem:[%s114] sm:$0xff] %v116
        %s118 = sand.u32 %s50, 1
        %s119 = scalar_lea.sflag [#allocation4], %s118
        %s120 = sand.u32 %s50, 1
        %s121 = smul.addr %s120, 8
        %s122 = scalar_lea.vmem [#allocation5], %s121
        // Predicated region
        $region29: #{tpu_custom_call.1} parent=23 // pred_check
          %p123 = pneg %p60
        $region30: #{tpu_custom_call.1} parent=23 // pred_check_branch
          %125 = sbr.rel (%p123) target = $region32
        $region31: #{tpu_custom_call.1} parent=23 // pred_region
          %s127 = ssub.s32 128, 128
          %128 = vsyncadd %s119, %s127
          %s129 = smul.addr %s16, 128
          %s130 = scalar_lea.hbm %s1, %s129
          %s132 = sshll.u32 %s122, 4
          %s133 = int_to_ptr.vmem [resolvable:$true] %s132
          %135 = dma.vmem_to_hbm [thread:$0]  %s133, 128, %s130, %s119
        $region32: #{tpu_custom_call.1} parent=23 // pred_fallthru
          _
      $region24: #{tpu_custom_call.1} parent=5 // pred_fallthru
        _
      %p136 = scmp.le.s32.totalorder 2, %s11
      // Predicated region
      $region33: #{tpu_custom_call.1} parent=5 // pred_check
        %p137 = pneg %p136
      $region34: #{tpu_custom_call.1} parent=5 // pred_check_branch
        %139 = sbr.rel (%p137) target = $region36
      $region35: #{tpu_custom_call.1} parent=5 // pred_region
        %s140 = ssub.s32 %s11, 2
        // Predicated region
        $region37: #{tpu_custom_call.1} parent=35 // pred_check
          %p141 = pneg %p66
        $region38: #{tpu_custom_call.1} parent=35 // pred_check_branch
          %143 = sbr.rel (%p141) target = $region40
        $region39: #{tpu_custom_call.1} parent=35 // pred_region
          %s144 = sand.u32 %s51, 1
          %s145 = scalar_lea.sflag [#allocation4], %s144
          %s146 = sand.u32 %s51, 1
          %s147 = smul.addr %s146, 8
          %s148 = scalar_lea.vmem [#allocation5], %s147
          %149 = dma.done %s145, 128
        $region40: #{tpu_custom_call.1} parent=35 // pred_fallthru
          _
      $region36: #{tpu_custom_call.1} parent=5 // pred_fallthru
        _
    $region6: #{tpu_custom_call.1} parent=1 // loop_footer
      %s15 = sadd.s32 1, %s11
    $region7: #{tpu_custom_call.1} parent=1 // loop_footer_branch
      %10 = sbr.rel target = $region3
    $region8: #{tpu_custom_call.1} parent=1 // loop_exit
      _
    %150 = vsyncpa [#allocation3], 1
    %s151 = scalar_lea.sflag [#allocation3], 1
    %152 = vsyncpa %s151, 1
    %153 = vsyncpa [#allocation4], 1
    %s154 = scalar_lea.sflag [#allocation4], 1
    %155 = vsyncpa %s154, 1

// kernel: tpu_custom_call.1
$region0: #{tpu_custom_call.1}
  #allocation0 [shape = 'u32[]', space=smem, size = 0x4, offset = 0x4, fixed_abs, tag = 'smem constant byte address 0x4 - core index']
  #allocation1 [shape = 'u32[144,128]{1,0:T(1,128)}', space=vmem, size = 0x12000, scoped, tag = 'internal scratch']
  #allocation2 [shape = 'f32[16,128]{1,0:T(8,128)}', space=vmem, size = 0x2000, scoped, tag = 'scratch operand']
  #allocation3 [shape = 'bf16[16,128]{1,0:T(8,128)(2,1)}', space=vmem, size = 0x1000, scoped, tag = 'scratch operand']
  %s0 = inlined_call_operand.hbm [shape: f32[16,128], index: 0, kind: input, shape index: {}]
  %s1 = inlined_call_operand.vmem [shape: f32[1,128], index: 1, kind: input, shape index: {}]
  %s2 = inlined_call_operand.hbm [shape: f32[1,128], index: 2, kind: input, shape index: {}]
  %s3 = inlined_call_operand.hbm [shape: bf16[128,128], index: 3, kind: input, shape index: {}]
  %s4 = inlined_call_operand.hbm [shape: f32[1,128], index: 4, kind: input, shape index: {}]
  %s5 = inlined_call_operand.vmem [shape: f32[2,1,128], index: 5, kind: input, shape index: {}]
  %s6 = inlined_call_operand.vmem [shape: f32[2,1,128], index: 6, kind: input, shape index: {}]
  %s7 = inlined_call_operand.hbm [shape: bf16[2,128,128], index: 7, kind: input, shape index: {}]
  %s8 = inlined_call_operand.vmem [shape: f32[2,1,128], index: 8, kind: input, shape index: {}]
  %s9 = inlined_call_operand.vmem [shape: f32[1,128], index: 9, kind: input, shape index: {}]
  %s10 = inlined_call_operand.vmem [shape: f32[1,128], index: 10, kind: input, shape index: {}]
  %s11 = inlined_call_operand.hbm [shape: bf16[128,128], index: 11, kind: input, shape index: {}]
  %s12 = inlined_call_operand.vmem [shape: f32[1,128], index: 12, kind: input, shape index: {}]
  %s13 = inlined_call_operand.hbm [shape: f32[2,1,128], index: 13, kind: output, shape index: {}]
  %s14 = sld [smem:[#allocation0]]
  $region121: #{tpu_custom_call.1} parent=0
    _
  %s16 = ssub.s32 1, %s14
  %s17 = scalar_select 0, %s16, %s14
  $region1: #{tpu_custom_call.1} parent=0
    #allocation4 [shape = 'u8[8192]{0}', space=vmem, size = 0x2000, scoped, tag = 'input window, operand 0, single buffered']
    #allocation5 [shape = 's32[2]{0}', space=sflag, size = 0x8, scoped, tag = 'scoped memory for tpu_custom_call.1']
    #allocation6 [shape = 's32[2]{0}', space=sflag, size = 0x8, scoped, tag = 'scoped memory for tpu_custom_call.1']
    #allocation7 [shape = 'u8[512]{0}', space=vmem, size = 0x400, scoped, tag = 'input window, operand 2, single buffered']
    #allocation8 [shape = 's32[1]{0}', space=sflag, size = 0x4, scoped, tag = 'scoped memory for tpu_custom_call.1']
    #allocation9 [shape = 'u8[32768]{0}', space=vmem, size = 0x8000, scoped, tag = 'input window, operand 3, single buffered']
    #allocation10 [shape = 'u8[512]{0}', space=vmem, size = 0x400, scoped, tag = 'input window, operand 4, single buffered']
    #allocation11 [shape = 's32[1]{0}', space=sflag, size = 0x4, scoped, tag = 'scoped memory for tpu_custom_call.1']
    #allocation12 [shape = 'u8[65536]{0}', space=vmem, size = 0x10000, scoped, tag = 'input window, operand 7']
    #allocation13 [shape = 'u8[32768]{0}', space=vmem, size = 0x8000, scoped, tag = 'input window, operand 11, single buffered']
    #allocation14 [shape = 'u8[1024]{0}', space=vmem, size = 0x400, scoped, tag = 'output window, operand 0, single buffered']
    %18 = vsyncpa [#allocation5], 0
    %19 = vsyncpa [#allocation8], 0
    %20 = vsyncpa [#allocation11], 0
    %21 = vsyncpa [#allocation6], 0
    loop: start=0, step=1, limit=4
    $region2: #{tpu_custom_call.1} parent=1 // loop_pre_header
      _
    $region3: #{tpu_custom_call.1} parent=1 // loop_header
      %s23 = sphi 0, %s27
      %p24 = scmp.ge.s32.totalorder %s23, 4
      %s30 = sphi 0, %s49
      %s31 = sphi 0, %s45
      %s32 = sphi 0, %s41
      %s33 = sphi 0, %s30
      %s34 = sphi 0, %s31
      %s35 = sphi 0, %s32
      %s36 = sphi 0, %s33
      %s37 = sphi 0, %s34
      %s38 = sphi 0, %s35
      %s52 = sphi 0, %s54
      %s55 = sphi 0, %s52
      %s56 = sphi 0, %s55
      %s72 = sphi 0, %s56
      %s76 = sphi 0, %s76
      %s78 = sphi 0, %s76
      %s79 = sphi 0, %s78
      %s93 = sphi 0, %s79
      %s97 = sphi 0, %s97
      %s99 = sphi 0, %s97
      %s100 = sphi 0, %s99
      %s114 = sphi 0, %s100
      %s118 = sphi 0, %s118
      %s120 = sphi 0, %s118
      %s121 = sphi 0, %s120
      %s135 = sphi 0, %s121
      %s139 = sphi 0, %s139
      %s141 = sphi 0, %s139
      %s142 = sphi 0, %s141
      %s156 = sphi 0, %s142
      %s162 = sphi 0, %s164
      %s165 = sphi 0, %s162
      %s166 = sphi 0, %s165
      %s182 = sphi 0, %s166
      %s188 = sphi 0, %s190
      %s191 = sphi 0, %s188
      %s192 = sphi 0, %s191
      %s208 = sphi 0, %s192
      %s216 = sphi 0, %s218
      %s219 = sphi 0, %s216
      %s220 = sphi 0, %s219
      %s236 = sphi 0, %s220
      %s244 = sphi 0, %s246
      %s247 = sphi 0, %s244
      %s248 = sphi 0, %s247
      %s264 = sphi 0, %s248
      %s268 = sphi 0, %s268
      %s270 = sphi 0, %s268
      %s271 = sphi 0, %s270
      %s285 = sphi 0, %s271
      %s289 = sphi 0, %s289
      %s291 = sphi 0, %s289
      %s292 = sphi 0, %s291
      %s306 = sphi 0, %s292
      %s310 = sphi 0, %s310
      %s312 = sphi 0, %s310
      %s313 = sphi 0, %s312
      %s327 = sphi 0, %s313
      %s331 = sphi 0, %s331
      %s333 = sphi 0, %s331
      %s334 = sphi 0, %s333
      %s348 = sphi 0, %s334
      %s354 = sphi 0, %s356
      %s357 = sphi 0, %s354
      %s358 = sphi 0, %s357
      %s374 = sphi 0, %s358
    $region4: #{tpu_custom_call.1} parent=1 // loop_header_branch
      %26 = sbr.rel (%p24) target = $region8
    $region5: #{tpu_custom_call.1} parent=1 // loop_body
      %s28 = ssub.s32 %s23, 1
      %s29 = ssub.s32 %s23, 2
      %s39 = sadd.s32 1, %s32
      %p40 = scmp.ge.s32.totalorder %s39, 1
      %s41 = scalar_select %p40, 0, %s39
      %s42 = sadd.s32 1, %s31
      %s43 = scalar_select %p40, %s42, %s31
      %p44 = scmp.ge.s32.totalorder %s43, 2
      %s45 = scalar_select %p44, 0, %s43
      %s46 = sadd.s32 1, %s30
      %s47 = scalar_select %p44, %s46, %s30
      %p48 = scmp.ge.s32.totalorder %s47, 1
      %s49 = scalar_select %p48, 0, %s47
      %s50 = ssub.s32 %s30, %s49
      %p51 = scmp.eq.s32.totalorder %s50, 0
      %s53 = sadd.s32 %s52, 1
      %s54 = scalar_select %p51, %s52, %s53
      %p57 = pneg %p51
      %p58 = scmp.eq.s32.totalorder %s23, 1
      %p59 = por %p57, %p58
      %p60 = scmp.ne.s32.totalorder %s52, %s55
      %p61 = scmp.eq.s32.totalorder %s23, 0
      %p62 = por %p60, %p61
      %p63 = scmp.ne.s32.totalorder %s52, %s55
      %p64 = scmp.eq.s32.totalorder %s28, 1
      %p65 = por %p63, %p64
      %p66 = scmp.ne.s32.totalorder %s55, %s56
      %p67 = scmp.eq.s32.totalorder %s28, 0
      %p68 = por %p66, %p67
      %p69 = scmp.ne.s32.totalorder %s55, %s56
      %p70 = scmp.eq.s32.totalorder %s29, 1
      %p71 = por %p69, %p70
      %p73 = scmp.ne.s32.totalorder %s56, %s72
      %p74 = scmp.eq.s32.totalorder %s29, 0
      %p75 = por %p73, %p74
      %s77 = sadd.s32 %s76, 1
      %p80 = scmp.eq.s32.totalorder %s23, 1
      %p81 = scmp.ne.s32.totalorder %s76, %s78
      %p82 = scmp.eq.s32.totalorder %s23, 0
      %p83 = por %p81, %p82
      %p84 = scmp.ne.s32.totalorder %s76, %s78
      %p85 = scmp.eq.s32.totalorder %s28, 1
      %p86 = por %p84, %p85
      %p87 = scmp.ne.s32.totalorder %s78, %s79
      %p88 = scmp.eq.s32.totalorder %s28, 0
      %p89 = por %p87, %p88
      %p90 = scmp.ne.s32.totalorder %s78, %s79
      %p91 = scmp.eq.s32.totalorder %s29, 1
      %p92 = por %p90, %p91
      %p94 = scmp.ne.s32.totalorder %s79, %s93
      %p95 = scmp.eq.s32.totalorder %s29, 0
      %p96 = por %p94, %p95
      %s98 = sadd.s32 %s97, 1
      %p101 = scmp.eq.s32.totalorder %s23, 1
      %p102 = scmp.ne.s32.totalorder %s97, %s99
      %p103 = scmp.eq.s32.totalorder %s23, 0
      %p104 = por %p102, %p103
      %p105 = scmp.ne.s32.totalorder %s97, %s99
      %p106 = scmp.eq.s32.totalorder %s28, 1
      %p107 = por %p105, %p106
      %p108 = scmp.ne.s32.totalorder %s99, %s100
      %p109 = scmp.eq.s32.totalorder %s28, 0
      %p110 = por %p108, %p109
      %p111 = scmp.ne.s32.totalorder %s99, %s100
      %p112 = scmp.eq.s32.totalorder %s29, 1
      %p113 = por %p111, %p112
      %p115 = scmp.ne.s32.totalorder %s100, %s114
      %p116 = scmp.eq.s32.totalorder %s29, 0
      %p117 = por %p115, %p116
      %s119 = sadd.s32 %s118, 1
      %p122 = scmp.eq.s32.totalorder %s23, 1
      %p123 = scmp.ne.s32.totalorder %s118, %s120
      %p124 = scmp.eq.s32.totalorder %s23, 0
      %p125 = por %p123, %p124
      %p126 = scmp.ne.s32.totalorder %s118, %s120
      %p127 = scmp.eq.s32.totalorder %s28, 1
      %p128 = por %p126, %p127
      %p129 = scmp.ne.s32.totalorder %s120, %s121
      %p130 = scmp.eq.s32.totalorder %s28, 0
      %p131 = por %p129, %p130
      %p132 = scmp.ne.s32.totalorder %s120, %s121
      %p133 = scmp.eq.s32.totalorder %s29, 1
      %p134 = por %p132, %p133
      %p136 = scmp.ne.s32.totalorder %s121, %s135
      %p137 = scmp.eq.s32.totalorder %s29, 0
      %p138 = por %p136, %p137
      %s140 = sadd.s32 %s139, 1
      %p143 = scmp.eq.s32.totalorder %s23, 1
      %p144 = scmp.ne.s32.totalorder %s139, %s141
      %p145 = scmp.eq.s32.totalorder %s23, 0
      %p146 = por %p144, %p145
      %p147 = scmp.ne.s32.totalorder %s139, %s141
      %p148 = scmp.eq.s32.totalorder %s28, 1
      %p149 = por %p147, %p148
      %p150 = scmp.ne.s32.totalorder %s141, %s142
      %p151 = scmp.eq.s32.totalorder %s28, 0
      %p152 = por %p150, %p151
      %p153 = scmp.ne.s32.totalorder %s141, %s142
      %p154 = scmp.eq.s32.totalorder %s29, 1
      %p155 = por %p153, %p154
      %p157 = scmp.ne.s32.totalorder %s142, %s156
      %p158 = scmp.eq.s32.totalorder %s29, 0
      %p159 = por %p157, %p158
      %s160 = ssub.s32 %s31, %s45
      %p161 = scmp.eq.s32.totalorder %s160, 0
      %s163 = sadd.s32 %s162, 1
      %s164 = scalar_select %p161, %s162, %s163
      %p167 = pneg %p161
      %p168 = scmp.eq.s32.totalorder %s23, 1
      %p169 = por %p167, %p168
      %p170 = scmp.ne.s32.totalorder %s162, %s165
      %p171 = scmp.eq.s32.totalorder %s23, 0
      %p172 = por %p170, %p171
      %p173 = scmp.ne.s32.totalorder %s162, %s165
      %p174 = scmp.eq.s32.totalorder %s28, 1
      %p175 = por %p173, %p174
      %p176 = scmp.ne.s32.totalorder %s165, %s166
      %p177 = scmp.eq.s32.totalorder %s28, 0
      %p178 = por %p176, %p177
      %p179 = scmp.ne.s32.totalorder %s165, %s166
      %p180 = scmp.eq.s32.totalorder %s29, 1
      %p181 = por %p179, %p180
      %p183 = scmp.ne.s32.totalorder %s166, %s182
      %p184 = scmp.eq.s32.totalorder %s29, 0
      %p185 = por %p183, %p184
      %s186 = ssub.s32 %s31, %s45
      %p187 = scmp.eq.s32.totalorder %s186, 0
      %s189 = sadd.s32 %s188, 1
      %s190 = scalar_select %p187, %s188, %s189
      %p193 = pneg %p187
      %p194 = scmp.eq.s32.totalorder %s23, 1
      %p195 = por %p193, %p194
      %p196 = scmp.ne.s32.totalorder %s188, %s191
      %p197 = scmp.eq.s32.totalorder %s23, 0
      %p198 = por %p196, %p197
      %p199 = scmp.ne.s32.totalorder %s188, %s191
      %p200 = scmp.eq.s32.totalorder %s28, 1
      %p201 = por %p199, %p200
      %p202 = scmp.ne.s32.totalorder %s191, %s192
      %p203 = scmp.eq.s32.totalorder %s28, 0
      %p204 = por %p202, %p203
      %p205 = scmp.ne.s32.totalorder %s191, %s192
      %p206 = scmp.eq.s32.totalorder %s29, 1
      %p207 = por %p205, %p206
      %p209 = scmp.ne.s32.totalorder %s192, %s208
      %p210 = scmp.eq.s32.totalorder %s29, 0
      %p211 = por %p209, %p210
      %s212 = ssub.s32 %s31, %s45
      %s213 = ssub.s32 %s32, %s41
      %s214 = sor.u32 %s212, %s213
      %p215 = scmp.eq.s32.totalorder %s214, 0
      %s217 = sadd.s32 %s216, 1
      %s218 = scalar_select %p215, %s216, %s217
      %p221 = pneg %p215
      %p222 = scmp.eq.s32.totalorder %s23, 1
      %p223 = por %p221, %p222
      %p224 = scmp.ne.s32.totalorder %s216, %s219
      %p225 = scmp.eq.s32.totalorder %s23, 0
      %p226 = por %p224, %p225
      %p227 = scmp.ne.s32.totalorder %s216, %s219
      %p228 = scmp.eq.s32.totalorder %s28, 1
      %p229 = por %p227, %p228
      %p230 = scmp.ne.s32.totalorder %s219, %s220
      %p231 = scmp.eq.s32.totalorder %s28, 0
      %p232 = por %p230, %p231
      %p233 = scmp.ne.s32.totalorder %s219, %s220
      %p234 = scmp.eq.s32.totalorder %s29, 1
      %p235 = por %p233, %p234
      %p237 = scmp.ne.s32.totalorder %s220, %s236
      %p238 = scmp.eq.s32.totalorder %s29, 0
      %p239 = por %p237, %p238
      %s240 = ssub.s32 %s31, %s45
      %s241 = ssub.s32 %s32, %s41
      %s242 = sor.u32 %s240, %s241
      %p243 = scmp.eq.s32.totalorder %s242, 0
      %s245 = sadd.s32 %s244, 1
      %s246 = scalar_select %p243, %s244, %s245
      %p249 = pneg %p243
      %p250 = scmp.eq.s32.totalorder %s23, 1
      %p251 = por %p249, %p250
      %p252 = scmp.ne.s32.totalorder %s244, %s247
      %p253 = scmp.eq.s32.totalorder %s23, 0
      %p254 = por %p252, %p253
      %p255 = scmp.ne.s32.totalorder %s244, %s247
      %p256 = scmp.eq.s32.totalorder %s28, 1
      %p257 = por %p255, %p256
      %p258 = scmp.ne.s32.totalorder %s247, %s248
      %p259 = scmp.eq.s32.totalorder %s28, 0
      %p260 = por %p258, %p259
      %p261 = scmp.ne.s32.totalorder %s247, %s248
      %p262 = scmp.eq.s32.totalorder %s29, 1
      %p263 = por %p261, %p262
      %p265 = scmp.ne.s32.totalorder %s248, %s264
      %p266 = scmp.eq.s32.totalorder %s29, 0
      %p267 = por %p265, %p266
      %s269 = sadd.s32 %s268, 1
      %p272 = scmp.eq.s32.totalorder %s23, 1
      %p273 = scmp.ne.s32.totalorder %s268, %s270
      %p274 = scmp.eq.s32.totalorder %s23, 0
      %p275 = por %p273, %p274
      %p276 = scmp.ne.s32.totalorder %s268, %s270
      %p277 = scmp.eq.s32.totalorder %s28, 1
      %p278 = por %p276, %p277
      %p279 = scmp.ne.s32.totalorder %s270, %s271
      %p280 = scmp.eq.s32.totalorder %s28, 0
      %p281 = por %p279, %p280
      %p282 = scmp.ne.s32.totalorder %s270, %s271
      %p283 = scmp.eq.s32.totalorder %s29, 1
      %p284 = por %p282, %p283
      %p286 = scmp.ne.s32.totalorder %s271, %s285
      %p287 = scmp.eq.s32.totalorder %s29, 0
      %p288 = por %p286, %p287
      %s290 = sadd.s32 %s289, 1
      %p293 = scmp.eq.s32.totalorder %s23, 1
      %p294 = scmp.ne.s32.totalorder %s289, %s291
      %p295 = scmp.eq.s32.totalorder %s23, 0
      %p296 = por %p294, %p295
      %p297 = scmp.ne.s32.totalorder %s289, %s291
      %p298 = scmp.eq.s32.totalorder %s28, 1
      %p299 = por %p297, %p298
      %p300 = scmp.ne.s32.totalorder %s291, %s292
      %p301 = scmp.eq.s32.totalorder %s28, 0
      %p302 = por %p300, %p301
      %p303 = scmp.ne.s32.totalorder %s291, %s292
      %p304 = scmp.eq.s32.totalorder %s29, 1
      %p305 = por %p303, %p304
      %p307 = scmp.ne.s32.totalorder %s292, %s306
      %p308 = scmp.eq.s32.totalorder %s29, 0
      %p309 = por %p307, %p308
      %s311 = sadd.s32 %s310, 1
      %p314 = scmp.eq.s32.totalorder %s23, 1
      %p315 = scmp.ne.s32.totalorder %s310, %s312
      %p316 = scmp.eq.s32.totalorder %s23, 0
      %p317 = por %p315, %p316
      %p318 = scmp.ne.s32.totalorder %s310, %s312
      %p319 = scmp.eq.s32.totalorder %s28, 1
      %p320 = por %p318, %p319
      %p321 = scmp.ne.s32.totalorder %s312, %s313
      %p322 = scmp.eq.s32.totalorder %s28, 0
      %p323 = por %p321, %p322
      %p324 = scmp.ne.s32.totalorder %s312, %s313
      %p325 = scmp.eq.s32.totalorder %s29, 1
      %p326 = por %p324, %p325
      %p328 = scmp.ne.s32.totalorder %s313, %s327
      %p329 = scmp.eq.s32.totalorder %s29, 0
      %p330 = por %p328, %p329
      %s332 = sadd.s32 %s331, 1
      %p335 = scmp.eq.s32.totalorder %s23, 1
      %p336 = scmp.ne.s32.totalorder %s331, %s333
      %p337 = scmp.eq.s32.totalorder %s23, 0
      %p338 = por %p336, %p337
      %p339 = scmp.ne.s32.totalorder %s331, %s333
      %p340 = scmp.eq.s32.totalorder %s28, 1
      %p341 = por %p339, %p340
      %p342 = scmp.ne.s32.totalorder %s333, %s334
      %p343 = scmp.eq.s32.totalorder %s28, 0
      %p344 = por %p342, %p343
      %p345 = scmp.ne.s32.totalorder %s333, %s334
      %p346 = scmp.eq.s32.totalorder %s29, 1
      %p347 = por %p345, %p346
      %p349 = scmp.ne.s32.totalorder %s334, %s348
      %p350 = scmp.eq.s32.totalorder %s29, 0
      %p351 = por %p349, %p350
      %s352 = ssub.s32 %s30, %s49
      %p353 = scmp.eq.s32.totalorder %s352, 0
      %s355 = sadd.s32 %s354, 1
      %s356 = scalar_select %p353, %s354, %s355
      %p359 = pneg %p353
      %p360 = scmp.eq.s32.totalorder %s23, 1
      %p361 = por %p359, %p360
      %p362 = scmp.ne.s32.totalorder %s354, %s357
      %p363 = scmp.eq.s32.totalorder %s23, 0
      %p364 = por %p362, %p363
      %p365 = scmp.ne.s32.totalorder %s354, %s357
      %p366 = scmp.eq.s32.totalorder %s28, 1
      %p367 = por %p365, %p366
      %p368 = scmp.ne.s32.totalorder %s357, %s358
      %p369 = scmp.eq.s32.totalorder %s28, 0
      %p370 = por %p368, %p369
      %p371 = scmp.ne.s32.totalorder %s357, %s358
      %p372 = scmp.eq.s32.totalorder %s29, 1
      %p373 = por %p371, %p372
      %p375 = scmp.ne.s32.totalorder %s358, %s374
      %p376 = scmp.eq.s32.totalorder %s29, 0
      %p377 = por %p375, %p376
      %p378 = scmp.le.s32.totalorder 1, %s23
      %p379 = scmp.lt.s32.totalorder %s23, 3
      %p380 = pnand %p378, %p379
      %p381 = pneg %p380
      // Predicated region
      $region9: #{tpu_custom_call.1} parent=5 // pred_check
        _
      $region10: #{tpu_custom_call.1} parent=5 // pred_check_branch
        %383 = sbr.rel (%p380) target = $region12
      $region11: #{tpu_custom_call.1} parent=5 // pred_region
        %s384 = ssub.s32 %s23, 1
        // Predicated region
        $region13: #{tpu_custom_call.1} parent=11 // pred_check
          %p385 = pneg %p68
        $region14: #{tpu_custom_call.1} parent=11 // pred_check_branch
          %387 = sbr.rel (%p385) target = $region16
        $region15: #{tpu_custom_call.1} parent=11 // pred_region
          %s388 = smul.u32 2, %s33
          %s390 = ssub.s32 256, 256
          %391 = vsyncadd [#allocation5], %s390
          %s392 = smul.addr %s388, 128
          %s393 = scalar_lea.hbm %s0, %s392
          %s394 = sshll.u32 [#allocation4], 4
          %s395 = int_to_ptr.vmem [resolvable:$true] %s394
          %400 = dma.hbm_to_vmem [thread:$0]  %s393, 256, %s395, [#allocation5], 128, 128, 8
        $region16: #{tpu_custom_call.1} parent=11 // pred_fallthru
          _
        // Predicated region
        $region17: #{tpu_custom_call.1} parent=11 // pred_check
          %p401 = pneg %p89
        $region18: #{tpu_custom_call.1} parent=11 // pred_check_branch
          %403 = sbr.rel (%p401) target = $region20
        $region19: #{tpu_custom_call.1} parent=11 // pred_region
          _
        $region20: #{tpu_custom_call.1} parent=11 // pred_fallthru
          _
        // Predicated region
        $region21: #{tpu_custom_call.1} parent=11 // pred_check
          %p404 = pneg %p110
        $region22: #{tpu_custom_call.1} parent=11 // pred_check_branch
          %406 = sbr.rel (%p404) target = $region24
        $region23: #{tpu_custom_call.1} parent=11 // pred_region
          %s408 = ssub.s32 16, 16
          %409 = vsyncadd [#allocation8], %s408
          %s411 = sshll.u32 [#allocation7], 4
          %s412 = int_to_ptr.vmem [resolvable:$true] %s411
          %414 = dma.hbm_to_vmem [thread:$0]  %s2, 16, %s412, [#allocation8]
        $region24: #{tpu_custom_call.1} parent=11 // pred_fallthru
          _
        // Predicated region
        $region25: #{tpu_custom_call.1} parent=11 // pred_check
          %p415 = pneg %p131
        $region26: #{tpu_custom_call.1} parent=11 // pred_check_branch
          %417 = sbr.rel (%p415) target = $region28
        $region27: #{tpu_custom_call.1} parent=11 // pred_region
          %s419 = ssub.s32 1024, 1024
          %420 = vsyncadd [#allocation8], %s419
          %s421 = sshll.u32 [#allocation9], 4
          %s422 = int_to_ptr.vmem [resolvable:$true] %s421
          %427 = dma.hbm_to_vmem [thread:$0]  %s3, 1024, %s422, [#allocation8], 64, 64, 4
        $region28: #{tpu_custom_call.1} parent=11 // pred_fallthru
          _
        // Predicated region
        $region29: #{tpu_custom_call.1} parent=11 // pred_check
          %p428 = pneg %p152
        $region30: #{tpu_custom_call.1} parent=11 // pred_check_branch
          %430 = sbr.rel (%p428) target = $region32
        $region31: #{tpu_custom_call.1} parent=11 // pred_region
          %s432 = ssub.s32 16, 16
          %433 = vsyncadd [#allocation11], %s432
          %s435 = sshll.u32 [#allocation10], 4
          %s436 = int_to_ptr.vmem [resolvable:$true] %s435
          %438 = dma.hbm_to_vmem [thread:$0]  %s4, 16, %s436, [#allocation11]
        $region32: #{tpu_custom_call.1} parent=11 // pred_fallthru
          _
        // Predicated region
        $region33: #{tpu_custom_call.1} parent=11 // pred_check
          %p439 = pneg %p281
        $region34: #{tpu_custom_call.1} parent=11 // pred_check_branch
          %441 = sbr.rel (%p439) target = $region36
        $region35: #{tpu_custom_call.1} parent=11 // pred_region
          _
        $region36: #{tpu_custom_call.1} parent=11 // pred_fallthru
          _
        // Predicated region
        $region37: #{tpu_custom_call.1} parent=11 // pred_check
          %p442 = pneg %p302
        $region38: #{tpu_custom_call.1} parent=11 // pred_check_branch
          %444 = sbr.rel (%p442) target = $region40
        $region39: #{tpu_custom_call.1} parent=11 // pred_region
          _
        $region40: #{tpu_custom_call.1} parent=11 // pred_fallthru
          _
        // Predicated region
        $region41: #{tpu_custom_call.1} parent=11 // pred_check
          %p445 = pneg %p323
        $region42: #{tpu_custom_call.1} parent=11 // pred_check_branch
          %447 = sbr.rel (%p445) target = $region44
        $region43: #{tpu_custom_call.1} parent=11 // pred_region
          %s449 = ssub.s32 1024, 1024
          %450 = vsyncadd [#allocation8], %s449
          %s451 = sshll.u32 [#allocation13], 4
          %s452 = int_to_ptr.vmem [resolvable:$true] %s451
          %457 = dma.hbm_to_vmem [thread:$0]  %s11, 1024, %s452, [#allocation8], 64, 64, 4
        $region44: #{tpu_custom_call.1} parent=11 // pred_fallthru
          _
        // Predicated region
        $region45: #{tpu_custom_call.1} parent=11 // pred_check
          %p458 = pneg %p344
        $region46: #{tpu_custom_call.1} parent=11 // pred_check_branch
          %460 = sbr.rel (%p458) target = $region48
        $region47: #{tpu_custom_call.1} parent=11 // pred_region
          _
        $region48: #{tpu_custom_call.1} parent=11 // pred_fallthru
          _
      $region12: #{tpu_custom_call.1} parent=5 // pred_fallthru
        _
      %p461 = scmp.lt.s32.totalorder %s23, 2
      // Predicated region
      $region49: #{tpu_custom_call.1} parent=5 // pred_check
        %p462 = pneg %p461
      $region50: #{tpu_custom_call.1} parent=5 // pred_check_branch
        %464 = sbr.rel (%p462) target = $region52
      $region51: #{tpu_custom_call.1} parent=5 // pred_region
        // Predicated region
        $region53: #{tpu_custom_call.1} parent=51 // pred_check
          %p465 = pneg %p172
        $region54: #{tpu_custom_call.1} parent=51 // pred_check_branch
          %467 = sbr.rel (%p465) target = $region56
        $region55: #{tpu_custom_call.1} parent=51 // pred_region
          %p468 = scmp.lt.s32.totalorder %s31, 1
          %s469 = scalar_select %p468, %s31, 1
          %s470 = scalar_lea.vmem %s5, %s469
        $region56: #{tpu_custom_call.1} parent=51 // pred_fallthru
          _
        // Predicated region
        $region57: #{tpu_custom_call.1} parent=51 // pred_check
          %p471 = pneg %p198
        $region58: #{tpu_custom_call.1} parent=51 // pred_check_branch
          %473 = sbr.rel (%p471) target = $region60
        $region59: #{tpu_custom_call.1} parent=51 // pred_region
          %p474 = scmp.lt.s32.totalorder %s31, 1
          %s475 = scalar_select %p474, %s31, 1
          %s476 = scalar_lea.vmem %s6, %s475
        $region60: #{tpu_custom_call.1} parent=51 // pred_fallthru
          _
        // Predicated region
        $region61: #{tpu_custom_call.1} parent=51 // pred_check
          %p477 = pneg %p226
        $region62: #{tpu_custom_call.1} parent=51 // pred_check_branch
          %479 = sbr.rel (%p477) target = $region64
        $region63: #{tpu_custom_call.1} parent=51 // pred_region
          %s480 = sand.u32 %s23, 1
          %s481 = scalar_lea.sflag [#allocation5], %s480
          %s482 = sand.u32 %s216, 1
          %s483 = smul.addr %s482, 64
          %s484 = scalar_lea.vmem [#allocation12], %s483
          %s486 = ssub.s32 1024, 1024
          %487 = vsyncadd %s481, %s486
          %s488 = smul.addr %s31, 16
          %s489 = sadd.s32 %s32, %s488
          %s490 = smul.addr %s489, 64
          %s491 = scalar_lea.hbm %s7, %s490
          %s492 = sshll.u32 %s484, 4
          %s493 = int_to_ptr.vmem [resolvable:$true] %s492
          %498 = dma.hbm_to_vmem [thread:$0]  %s491, 1024, %s493, %s481, 64, 64, 4
        $region64: #{tpu_custom_call.1} parent=51 // pred_fallthru
          _
        // Predicated region
        $region65: #{tpu_custom_call.1} parent=51 // pred_check
          %p499 = pneg %p254
        $region66: #{tpu_custom_call.1} parent=51 // pred_check_branch
          %501 = sbr.rel (%p499) target = $region68
        $region67: #{tpu_custom_call.1} parent=51 // pred_region
          %p502 = scmp.lt.s32.totalorder %s31, 1
          %s503 = scalar_select %p502, %s31, 1
          %p504 = scmp.lt.s32.totalorder %s32, 0
          %s505 = scalar_select %p504, %s32, 0
          %s506 = sadd.s32 %s505, %s503
          %s507 = scalar_lea.vmem %s8, %s506
        $region68: #{tpu_custom_call.1} parent=51 // pred_fallthru
          _
      $region52: #{tpu_custom_call.1} parent=5 // pred_fallthru
        _
      %p508 = scmp.le.s32.totalorder 1, %s23
      %p509 = scmp.lt.s32.totalorder %s23, 3
      %p510 = pnand %p508, %p509
      %p511 = pneg %p510
      // Predicated region
      $region69: #{tpu_custom_call.1} parent=5 // pred_check
        _
      $region70: #{tpu_custom_call.1} parent=5 // pred_check_branch
        %513 = sbr.rel (%p510) target = $region72
      $region71: #{tpu_custom_call.1} parent=5 // pred_region
        %s514 = ssub.s32 %s23, 1
        // Predicated region
        $region73: #{tpu_custom_call.1} parent=71 // pred_check
          %p515 = pneg %p68
        $region74: #{tpu_custom_call.1} parent=71 // pred_check_branch
          %517 = sbr.rel (%p515) target = $region76
        $region75: #{tpu_custom_call.1} parent=71 // pred_region
          %518 = dma.done [#allocation5], 256
        $region76: #{tpu_custom_call.1} parent=71 // pred_fallthru
          _
        // Predicated region
        $region77: #{tpu_custom_call.1} parent=71 // pred_check
          %p519 = pneg %p110
        $region78: #{tpu_custom_call.1} parent=71 // pred_check_branch
          %521 = sbr.rel (%p519) target = $region80
        $region79: #{tpu_custom_call.1} parent=71 // pred_region
          %522 = dma.done [#allocation8], 16
        $region80: #{tpu_custom_call.1} parent=71 // pred_fallthru
          _
        // Predicated region
        $region81: #{tpu_custom_call.1} parent=71 // pred_check
          %p523 = pneg %p131
        $region82: #{tpu_custom_call.1} parent=71 // pred_check_branch
          %525 = sbr.rel (%p523) target = $region84
        $region83: #{tpu_custom_call.1} parent=71 // pred_region
          %526 = dma.done [#allocation8], 1024
        $region84: #{tpu_custom_call.1} parent=71 // pred_fallthru
          _
        // Predicated region
        $region85: #{tpu_custom_call.1} parent=71 // pred_check
          %p527 = pneg %p152
        $region86: #{tpu_custom_call.1} parent=71 // pred_check_branch
          %529 = sbr.rel (%p527) target = $region88
        $region87: #{tpu_custom_call.1} parent=71 // pred_region
          %530 = dma.done [#allocation11], 16
        $region88: #{tpu_custom_call.1} parent=71 // pred_fallthru
          _
        %s531 = sand.u32 %s28, 1
        %s532 = scalar_lea.sflag [#allocation5], %s531
        %s533 = sand.u32 %s219, 1
        %s534 = smul.addr %s533, 64
        %s535 = scalar_lea.vmem [#allocation12], %s534
        // Predicated region
        $region89: #{tpu_custom_call.1} parent=71 // pred_check
          %p536 = pneg %p232
        $region90: #{tpu_custom_call.1} parent=71 // pred_check_branch
          %538 = sbr.rel (%p536) target = $region92
        $region91: #{tpu_custom_call.1} parent=71 // pred_region
          %539 = dma.done %s532, 1024
        $region92: #{tpu_custom_call.1} parent=71 // pred_fallthru
          _
        // Predicated region
        $region93: #{tpu_custom_call.1} parent=71 // pred_check
          %p540 = pneg %p323
        $region94: #{tpu_custom_call.1} parent=71 // pred_check_branch
          %542 = sbr.rel (%p540) target = $region96
        $region95: #{tpu_custom_call.1} parent=71 // pred_region
          %543 = dma.done [#allocation8], 1024
        $region96: #{tpu_custom_call.1} parent=71 // pred_fallthru
          _
        %p544 = pneg %p68
        %p545 = pneg %p65
        %p546 = pneg %p89
        %p547 = pneg %p86
        %p548 = pneg %p110
        %p549 = pneg %p107
        %p550 = pneg %p131
        %p551 = pneg %p128
        %p552 = pneg %p152
        %p553 = pneg %p149
        %p554 = scmp.lt.s32.totalorder %s34, 1
        %s555 = scalar_select %p554, %s34, 1
        %s556 = scalar_lea.vmem %s5, %s555
        %p557 = pneg %p178
        %p558 = pneg %p175
        %p559 = scmp.lt.s32.totalorder %s34, 1
        %s560 = scalar_select %p559, %s34, 1
        %s561 = scalar_lea.vmem %s6, %s560
        %p562 = pneg %p204
        %p563 = pneg %p201
        %s564 = sand.u32 %s28, 1
        %s565 = scalar_lea.sflag [#allocation5], %s564
        %s566 = sand.u32 %s219, 1
        %s567 = smul.addr %s566, 64
        %s568 = scalar_lea.vmem [#allocation12], %s567
        %p569 = pneg %p232
        %p570 = pneg %p229
        %p571 = scmp.lt.s32.totalorder %s34, 1
        %s572 = scalar_select %p571, %s34, 1
        %p573 = scmp.lt.s32.totalorder %s35, 0
        %s574 = scalar_select %p573, %s35, 0
        %s575 = sadd.s32 %s574, %s572
        %s576 = scalar_lea.vmem %s8, %s575
        %p577 = pneg %p260
        %p578 = pneg %p257
        %p579 = pneg %p281
        %p580 = pneg %p278
        %p581 = pneg %p302
        %p582 = pneg %p299
        %p583 = pneg %p323
        %p584 = pneg %p320
        %p585 = pneg %p344
        %p586 = pneg %p341
        %p587 = pneg %p370
        %p588 = pneg %p367
        %s589 = smul.u32 2, %s33
        %p590 = scmp.lt.s32.totalorder %s34, 1
        %s591 = scalar_select %p590, %s34, 1
        %s592 = scalar_lea.vmem %s5, %s591
        %p593 = scmp.lt.s32.totalorder %s34, 1
        %s594 = scalar_select %p593, %s34, 1
        %s595 = scalar_lea.vmem %s6, %s594
        %p596 = scmp.lt.s32.totalorder %s34, 1
        %s597 = scalar_select %p596, %s34, 1
        %p598 = scmp.lt.s32.totalorder %s35, 0
        %s599 = scalar_select %p598, %s35, 0
        %s600 = sadd.s32 %s599, %s597
        %s601 = scalar_lea.vmem %s8, %s600
        %s602 = smul.u32 2, %s33
        %p604 = scmp.eq.s32.totalorder %s34, 0
        %p605 = scmp.eq.s32.totalorder %s35, 0
        %p606 = pnand %p604, %p605
        %p607 = pneg %p606
        // Predicated region
        $region97: #{tpu_custom_call.1} parent=71 // pred_check
          _
        $region98: #{tpu_custom_call.1} parent=71 // pred_check_branch
          %609 = sbr.rel (%p606) target = $region100
        $region99: #{tpu_custom_call.1} parent=71 // pred_region
          %v610 = vld [vmem:[#allocation4] sm:$0xff]
          %v611 = vld [vmem:[#allocation4 + $0x8] sm:$0xff]
          %v612 = vld [vmem:[%s1] sm:$0x1]
          %v613 = vld [vmem:[#allocation7] sm:$0x1]
          %614 = vadd.xlane.f32.xlu0 %v610
          %v615 = vpop.xlane.xlu0 %614
          %616 = vadd.xlane.f32.xlu0 %v611
          %v617 = vpop.xlane.xlu0 %616
          %v618 = vmul.f32 %v610, %v610
          %v619 = vmul.f32 %v611, %v611
          %620 = vadd.xlane.f32.xlu0 %v618
          %v621 = vpop.xlane.xlu0 %620
          %622 = vadd.xlane.f32.xlu0 %v619
          %v623 = vpop.xlane.xlu0 %622
          %v624 = vmul.f32 %v615, 0.0625
          %v625 = vmul.f32 %v617, 0.0625
          %v626 = vmul.f32 %v621, 0.0625
          %v627 = vmul.f32 %v623, 0.0625
          %v628 = vmul.f32 %v624, %v624
          %v629 = vmul.f32 %v625, %v625
          %v630 = vsub.f32 %v626, %v628
          %v631 = vsub.f32 %v627, %v629
          %v632 = vmax.f32 %v630, 0.0
          %v633 = vmax.f32 %v631, 0.0
          %v634 = vadd.f32 %v632, 1e-05
          %v635 = vadd.f32 %v633, 1e-05
          %v636 = vrsqrt.pop %v634
          %v637 = vrsqrt.pop %v635
          %v638 = vsub.f32 %v610, %v624
          %v639 = vsub.f32 %v611, %v625
          %v640 = vmul.f32 %v638, %v636
          %v641 = vmul.f32 %v639, %v637
          %v643 = vlaneseq
          %v644 = vshrl.u32 %v643, 7
          %v645 = vsub.s32 0, %v644
          %v646 = vrot.slane %v612, %v645
          %v648 = vmul.f32 %v640, %v646
          %v649 = vmul.f32 %v641, %v646
          %v651 = vlaneseq
          %v652 = vshrl.u32 %v651, 7
          %v653 = vsub.s32 0, %v652
          %v654 = vrot.slane %v613, %v653
          %v656 = vadd.f32 %v648, %v654
          %v657 = vadd.f32 %v649, %v654
          %v658 = vpack.c.bf16 %v657, %v656
          %v659 = vld [vmem:[#allocation9] sm:$0xf]
          %v660 = vld [vmem:[#allocation9 + $0x4] sm:$0xf]
          %v661 = vld [vmem:[#allocation9 + $0x8] sm:$0xf]
          %v662 = vld [vmem:[#allocation9 + $0xc] sm:$0xf]
          %v663 = vld [vmem:[#allocation9 + $0x10] sm:$0xf]
          %v664 = vld [vmem:[#allocation9 + $0x14] sm:$0xf]
          %v665 = vld [vmem:[#allocation9 + $0x18] sm:$0xf]
          %v666 = vld [vmem:[#allocation9 + $0x1c] sm:$0xf]
          %v667 = vld [vmem:[#allocation9 + $0x20] sm:$0xf]
          %v668 = vld [vmem:[#allocation9 + $0x24] sm:$0xf]
          %v669 = vld [vmem:[#allocation9 + $0x28] sm:$0xf]
          %v670 = vld [vmem:[#allocation9 + $0x2c] sm:$0xf]
          %v671 = vld [vmem:[#allocation9 + $0x30] sm:$0xf]
          %v672 = vld [vmem:[#allocation9 + $0x34] sm:$0xf]
          %v673 = vld [vmem:[#allocation9 + $0x38] sm:$0xf]
          %v674 = vld [vmem:[#allocation9 + $0x3c] sm:$0xf]
          %v675 = vld [vmem:[#allocation10] sm:$0x1]
          %v677 = vlaneseq
          %v678 = vshrl.u32 %v677, 7
          %v679 = vsub.s32 0, %v678
          %v680 = vrot.slane %v675, %v679
          %v698 = vunpack.c.l.b16 %v659
          %v699 = vunpack.c.l.b16 %v660
          %v700 = vunpack.c.l.b16 %v661
          %v701 = vunpack.c.l.b16 %v662
          %v702 = vunpack.c.l.b16 %v663
          %v703 = vunpack.c.l.b16 %v664
          %v704 = vunpack.c.l.b16 %v665
          %v705 = vunpack.c.l.b16 %v666
          %v706 = vunpack.c.l.b16 %v667
          %v707 = vunpack.c.l.b16 %v668
          %v708 = vunpack.c.l.b16 %v669
          %v709 = vunpack.c.l.b16 %v670
          %v710 = vunpack.c.l.b16 %v671
          %v711 = vunpack.c.l.b16 %v672
          %v712 = vunpack.c.l.b16 %v673
          %v713 = vunpack.c.l.b16 %v674
          %v714 = vpack.c.b16 %v699, %v698
          %v715 = vpack.c.b16 %v701, %v700
          %v716 = vpack.c.b16 %v703, %v702
          %v717 = vpack.c.b16 %v705, %v704
          %v718 = vpack.c.b16 %v707, %v706
          %v719 = vpack.c.b16 %v709, %v708
          %v720 = vpack.c.b16 %v711, %v710
          %v721 = vpack.c.b16 %v713, %v712
          %730 = vmatprep.subr.bf16.mxu0 0
          %731 = vmatpush1.bf16.msra.mxu0 %v721
          %732 = vmatprep.subr.bf16.mxu0 0
          %733 = vmatpush1.bf16.msra.mxu0 %v720
          %734 = vmatprep.subr.bf16.mxu0 0
          %735 = vmatpush1.bf16.msra.mxu0 %v719
          %736 = vmatprep.subr.bf16.mxu0 0
          %737 = vmatpush1.bf16.msra.mxu0 %v718
          %738 = vmatprep.subr.bf16.mxu0 0
          %739 = vmatpush1.bf16.msra.mxu0 %v717
          %740 = vmatprep.subr.bf16.mxu0 0
          %741 = vmatpush1.bf16.msra.mxu0 %v716
          %742 = vmatprep.subr.bf16.mxu0 0
          %743 = vmatpush1.bf16.msra.mxu0 %v715
          %744 = vmatprep.subr.bf16.mxu0 0
          %745 = vmatpush1.bf16.msra.mxu0 %v714
          %746 = vmatprep.subr.bf16.mxu0 0
          %747 = vmatpush2.bf16.msra.mxu0 0
          %748 = vmatprep.subr.bf16.mxu0 0
          %749 = vmatpush2.bf16.msra.mxu0 0
          %750 = vmatprep.subr.bf16.mxu0 0
          %751 = vmatpush2.bf16.msra.mxu0 0
          %752 = vmatprep.subr.bf16.mxu0 0
          %753 = vmatpush2.bf16.msra.mxu0 0
          %754 = vmatprep.subr.bf16.mxu0 0
          %755 = vmatpush2.bf16.msra.mxu0 0
          %756 = vmatprep.subr.bf16.mxu0 0
          %757 = vmatpush2.bf16.msra.mxu0 0
          %758 = vmatprep.subr.bf16.mxu0 0
          %759 = vmatpush2.bf16.msra.mxu0 0
          %760 = vmatprep.subr.bf16.mxu0 0
          %761 = vmatpush2.bf16.msra.mxu0 0
          %762 = vmatprep.mubr.bf16.mxu0 0
          %763 = vmatmul.mubr.bf16.gmra.mxu0 %v658
          %v764 = vpop.f32.mrf.mxu0
          %v765 = vadd.f32 %v680, %v764
          %v766 = vpop.f32.mrf.mxu0
          %v767 = vpop.f32.mrf.mxu0
          %v768 = vadd.f32 %v680, %v767
          %v769 = vpop.f32.mrf.mxu0
          %770 = vdwg.mxu0
          %v771 = vmax.f32 %v765, 0.0
          %v772 = vmax.f32 %v768, 0.0
          %773 = vst [vmem:[#allocation2] sm:$0xff] %v771
          %774 = vst [vmem:[#allocation2 + $0x8] sm:$0xff] %v772
        $region100: #{tpu_custom_call.1} parent=71 // pred_fallthru
          _
        // Predicated region
        $region101: #{tpu_custom_call.1} parent=71 // pred_check
          %p775 = pneg %p605
        $region102: #{tpu_custom_call.1} parent=71 // pred_check_branch
          %777 = sbr.rel (%p775) target = $region104
        $region103: #{tpu_custom_call.1} parent=71 // pred_region
          %v778 = vld [vmem:[#allocation2] sm:$0xff]
          %v779 = vld [vmem:[#allocation2 + $0x8] sm:$0xff]
          %v780 = vld [vmem:[%s592] sm:$0x1]
          %v781 = vld [vmem:[%s595] sm:$0x1]
          %782 = vadd.xlane.f32.xlu0 %v778
          %v783 = vpop.xlane.xlu0 %782
          %784 = vadd.xlane.f32.xlu0 %v779
          %v785 = vpop.xlane.xlu0 %784
          %v786 = vmul.f32 %v778, %v778
          %v787 = vmul.f32 %v779, %v779
          %788 = vadd.xlane.f32.xlu0 %v786
          %v789 = vpop.xlane.xlu0 %788
          %790 = vadd.xlane.f32.xlu0 %v787
          %v791 = vpop.xlane.xlu0 %790
          %v792 = vmul.f32 %v783, 0.03125
          %v793 = vmul.f32 %v785, 0.03125
          %v794 = vmul.f32 %v789, 0.03125
          %v795 = vmul.f32 %v791, 0.03125
          %v796 = vmul.f32 %v792, %v792
          %v797 = vmul.f32 %v793, %v793
          %v798 = vsub.f32 %v794, %v796
          %v799 = vsub.f32 %v795, %v797
          %v800 = vmax.f32 %v798, 0.0
          %v801 = vmax.f32 %v799, 0.0
          %v802 = vadd.f32 %v800, 1e-05
          %v803 = vadd.f32 %v801, 1e-05
          %v804 = vrsqrt.pop %v802
          %v805 = vrsqrt.pop %v803
          %v806 = vsub.f32 %v778, %v792
          %v807 = vsub.f32 %v779, %v793
          %v808 = vmul.f32 %v806, %v804
          %v809 = vmul.f32 %v807, %v805
          %v811 = vlaneseq
          %v812 = vshrl.u32 %v811, 7
          %v813 = vsub.s32 0, %v812
          %v814 = vrot.slane %v780, %v813
          %v816 = vmul.f32 %v808, %v814
          %v817 = vmul.f32 %v809, %v814
          %v819 = vlaneseq
          %v820 = vshrl.u32 %v819, 7
          %v821 = vsub.s32 0, %v820
          %v822 = vrot.slane %v781, %v821
          %v824 = vadd.f32 %v816, %v822
          %v825 = vadd.f32 %v817, %v822
          %v826 = vpack.c.bf16 %v825, %v824
          %v828 = vunpack.c.l.b16 %v826
          %v829 = vunpack.c.h.b16 %v826
          %v830 = vpack.c.b16 %v828, %v828
          %v831 = vpack.c.b16 %v829, %v829
          %834 = vst [vmem:[#allocation3] sm:$0xf] %v830
          %835 = vst [vmem:[#allocation3 + $0x4] sm:$0xf] %v831
        $region104: #{tpu_custom_call.1} parent=71 // pred_fallthru
          _
        %v836 = vld [vmem:[#allocation3] sm:$0xf]
        %v837 = vld [vmem:[#allocation3 + $0x4] sm:$0xf]
        %v838 = vld [vmem:[%s535] sm:$0xf]
        %v839 = vld [vmem:[%s535 + $0x4] sm:$0xf]
        %v840 = vld [vmem:[%s535 + $0x8] sm:$0xf]
        %v841 = vld [vmem:[%s535 + $0xc] sm:$0xf]
        %v842 = vld [vmem:[%s535 + $0x10] sm:$0xf]
        %v843 = vld [vmem:[%s535 + $0x14] sm:$0xf]
        %v844 = vld [vmem:[%s535 + $0x18] sm:$0xf]
        %v845 = vld [vmem:[%s535 + $0x1c] sm:$0xf]
        %v846 = vld [vmem:[%s535 + $0x20] sm:$0xf]
        %v847 = vld [vmem:[%s535 + $0x24] sm:$0xf]
        %v848 = vld [vmem:[%s535 + $0x28] sm:$0xf]
        %v849 = vld [vmem:[%s535 + $0x2c] sm:$0xf]
        %v850 = vld [vmem:[%s535 + $0x30] sm:$0xf]
        %v851 = vld [vmem:[%s535 + $0x34] sm:$0xf]
        %v852 = vld [vmem:[%s535 + $0x38] sm:$0xf]
        %v853 = vld [vmem:[%s535 + $0x3c] sm:$0xf]
        %v854 = vld [vmem:[%s601] sm:$0x1]
        %v856 = vlaneseq
        %v857 = vshrl.u32 %v856, 7
        %v858 = vsub.s32 0, %v857
        %v859 = vrot.slane %v854, %v858
        %v863 = vunpack.c.l.b16 %v836
        %v864 = vunpack.c.l.b16 %v837
        %v865 = vpack.c.b16 %v864, %v863
        %v883 = vunpack.c.l.b16 %v838
        %v884 = vunpack.c.l.b16 %v839
        %v885 = vunpack.c.l.b16 %v840
        %v886 = vunpack.c.l.b16 %v841
        %v887 = vunpack.c.l.b16 %v842
        %v888 = vunpack.c.l.b16 %v843
        %v889 = vunpack.c.l.b16 %v844
        %v890 = vunpack.c.l.b16 %v845
        %v891 = vunpack.c.l.b16 %v846
        %v892 = vunpack.c.l.b16 %v847
        %v893 = vunpack.c.l.b16 %v848
        %v894 = vunpack.c.l.b16 %v849
        %v895 = vunpack.c.l.b16 %v850
        %v896 = vunpack.c.l.b16 %v851
        %v897 = vunpack.c.l.b16 %v852
        %v898 = vunpack.c.l.b16 %v853
        %v899 = vpack.c.b16 %v884, %v883
        %v900 = vpack.c.b16 %v886, %v885
        %v901 = vpack.c.b16 %v888, %v887
        %v902 = vpack.c.b16 %v890, %v889
        %v903 = vpack.c.b16 %v892, %v891
        %v904 = vpack.c.b16 %v894, %v893
        %v905 = vpack.c.b16 %v896, %v895
        %v906 = vpack.c.b16 %v898, %v897
        %915 = vmatprep.subr.bf16.mxu0 0
        %916 = vmatpush1.bf16.msra.mxu0 %v906
        %917 = vmatprep.subr.bf16.mxu0 0
        %918 = vmatpush1.bf16.msra.mxu0 %v905
        %919 = vmatprep.subr.bf16.mxu0 0
        %920 = vmatpush1.bf16.msra.mxu0 %v904
        %921 = vmatprep.subr.bf16.mxu0 0
        %922 = vmatpush1.bf16.msra.mxu0 %v903
        %923 = vmatprep.subr.bf16.mxu0 0
        %924 = vmatpush1.bf16.msra.mxu0 %v902
        %925 = vmatprep.subr.bf16.mxu0 0
        %926 = vmatpush1.bf16.msra.mxu0 %v901
        %927 = vmatprep.subr.bf16.mxu0 0
        %928 = vmatpush1.bf16.msra.mxu0 %v900
        %929 = vmatprep.subr.bf16.mxu0 0
        %930 = vmatpush1.bf16.msra.mxu0 %v899
        %931 = vmatprep.subr.bf16.mxu0 0
        %932 = vmatpush2.bf16.msra.mxu0 0
        %933 = vmatprep.subr.bf16.mxu0 0
        %934 = vmatpush2.bf16.msra.mxu0 0
        %935 = vmatprep.subr.bf16.mxu0 0
        %936 = vmatpush2.bf16.msra.mxu0 0
        %937 = vmatprep.subr.bf16.mxu0 0
        %938 = vmatpush2.bf16.msra.mxu0 0
        %939 = vmatprep.subr.bf16.mxu0 0
        %940 = vmatpush2.bf16.msra.mxu0 0
        %941 = vmatprep.subr.bf16.mxu0 0
        %942 = vmatpush2.bf16.msra.mxu0 0
        %943 = vmatprep.subr.bf16.mxu0 0
        %944 = vmatpush2.bf16.msra.mxu0 0
        %945 = vmatprep.subr.bf16.mxu0 0
        %946 = vmatpush2.bf16.msra.mxu0 0
        %947 = vmatprep.mubr.bf16.mxu0 0
        %948 = vmatmul.mubr.bf16.gmra.mxu0 %v865
        %v949 = vpop.f32.mrf.mxu0
        %v950 = vadd.f32 %v859, %v949
        %v951 = vpop.f32.mrf.mxu0
        %v952 = vpop.f32.mrf.mxu0
        %v953 = vadd.f32 %v859, %v952
        %v954 = vpop.f32.mrf.mxu0
        %955 = vdwg.mxu0
        %v956 = vmax.f32 %v950, 0.0
        %v957 = vmax.f32 %v953, 0.0
        %v958 = vld [vmem:[#allocation2] sm:$0xff]
        %v959 = vld [vmem:[#allocation2 + $0x8] sm:$0xff]
        %v960 = vadd.f32 %v956, %v958
        %v961 = vadd.f32 %v957, %v959
        %962 = vst [vmem:[#allocation2] sm:$0xff] %v960
        %963 = vst [vmem:[#allocation2 + $0x8] sm:$0xff] %v961
        %p964 = scmp.eq.s32.totalorder %s34, 1
        %p965 = pnand %p964, %p605
        %p966 = pneg %p965
        // Predicated region
        $region105: #{tpu_custom_call.1} parent=71 // pred_check
          _
        $region106: #{tpu_custom_call.1} parent=71 // pred_check_branch
          %968 = sbr.rel (%p965) target = $region108
        $region107: #{tpu_custom_call.1} parent=71 // pred_region
          %v969 = vld [vmem:[#allocation2] sm:$0xff]
          %v970 = vld [vmem:[#allocation2 + $0x8] sm:$0xff]
          %v971 = vld [vmem:[%s9] sm:$0x1]
          %v972 = vld [vmem:[%s10] sm:$0x1]
          %973 = vadd.xlane.f32.xlu0 %v969
          %v974 = vpop.xlane.xlu0 %973
          %975 = vadd.xlane.f32.xlu0 %v970
          %v976 = vpop.xlane.xlu0 %975
          %v977 = vmul.f32 %v969, %v969
          %v978 = vmul.f32 %v970, %v970
          %979 = vadd.xlane.f32.xlu0 %v977
          %v980 = vpop.xlane.xlu0 %979
          %981 = vadd.xlane.f32.xlu0 %v978
          %v982 = vpop.xlane.xlu0 %981
          %v983 = vmul.f32 %v974, 0.03125
          %v984 = vmul.f32 %v976, 0.03125
          %v985 = vmul.f32 %v980, 0.03125
          %v986 = vmul.f32 %v982, 0.03125
          %v987 = vmul.f32 %v983, %v983
          %v988 = vmul.f32 %v984, %v984
          %v989 = vsub.f32 %v985, %v987
          %v990 = vsub.f32 %v986, %v988
          %v991 = vmax.f32 %v989, 0.0
          %v992 = vmax.f32 %v990, 0.0
          %v993 = vadd.f32 %v991, 1e-05
          %v994 = vadd.f32 %v992, 1e-05
          %v995 = vrsqrt.pop %v993
          %v996 = vrsqrt.pop %v994
          %v997 = vsub.f32 %v969, %v983
          %v998 = vsub.f32 %v970, %v984
          %v999 = vmul.f32 %v997, %v995
          %v1000 = vmul.f32 %v998, %v996
          %v1002 = vlaneseq
          %v1003 = vshrl.u32 %v1002, 7
          %v1004 = vsub.s32 0, %v1003
          %v1005 = vrot.slane %v971, %v1004
          %v1007 = vmul.f32 %v999, %v1005
          %v1008 = vmul.f32 %v1000, %v1005
          %v1010 = vlaneseq
          %v1011 = vshrl.u32 %v1010, 7
          %v1012 = vsub.s32 0, %v1011
          %v1013 = vrot.slane %v972, %v1012
          %v1015 = vadd.f32 %v1007, %v1013
          %v1016 = vadd.f32 %v1008, %v1013
          %v1017 = vrot.slane %v1015, 4
          %v1018 = vadd.f32 %v1015, %v1017
          %v1019 = vrot.slane %v1018, 2
          %v1020 = vadd.f32 %v1018, %v1019
          %v1021 = vrot.slane %v1020, 1
          %v1022 = vadd.f32 %v1020, %v1021
          %v1023 = vrot.slane %v1016, 4
          %v1024 = vadd.f32 %v1016, %v1023
          %v1025 = vrot.slane %v1024, 2
          %v1026 = vadd.f32 %v1024, %v1025
          %v1027 = vrot.slane %v1026, 1
          %v1028 = vadd.f32 %v1026, %v1027
          %v1029 = vrcp.pop 8.0
          %v1030 = vmul.f32 %v1022, %v1029
          %v1031 = vmul.f32 %v1028, %v1029
          %v1032 = vpack.c.bf16 %v1030, %v1030
          %v1033 = vpack.c.bf16 %v1031, %v1031
          %v1034 = vld [vmem:[#allocation13] sm:$0xf]
          %v1035 = vld [vmem:[#allocation13 + $0x4] sm:$0xf]
          %v1036 = vld [vmem:[#allocation13 + $0x8] sm:$0xf]
          %v1037 = vld [vmem:[#allocation13 + $0xc] sm:$0xf]
          %v1038 = vld [vmem:[#allocation13 + $0x10] sm:$0xf]
          %v1039 = vld [vmem:[#allocation13 + $0x14] sm:$0xf]
          %v1040 = vld [vmem:[#allocation13 + $0x18] sm:$0xf]
          %v1041 = vld [vmem:[#allocation13 + $0x1c] sm:$0xf]
          %v1042 = vld [vmem:[#allocation13 + $0x20] sm:$0xf]
          %v1043 = vld [vmem:[#allocation13 + $0x24] sm:$0xf]
          %v1044 = vld [vmem:[#allocation13 + $0x28] sm:$0xf]
          %v1045 = vld [vmem:[#allocation13 + $0x2c] sm:$0xf]
          %v1046 = vld [vmem:[#allocation13 + $0x30] sm:$0xf]
          %v1047 = vld [vmem:[#allocation13 + $0x34] sm:$0xf]
          %v1048 = vld [vmem:[#allocation13 + $0x38] sm:$0xf]
          %v1049 = vld [vmem:[#allocation13 + $0x3c] sm:$0xf]
          %v1050 = vld [vmem:[%s12] sm:$0x1]
          %v1052 = vlaneseq
          %v1053 = vshrl.u32 %v1052, 7
          %v1054 = vsub.s32 0, %v1053
          %v1055 = vrot.slane %v1050, %v1054
          %v1059 = vunpack.c.l.b16 %v1032
          %v1060 = vunpack.c.l.b16 %v1033
          %vm1061 = vcmask 1041409
          %v1062 = vsel %vm1061, %v1060, %v1059
          %v1063 = vpack.c.b16 %v1062, %v1062
          %v1081 = vunpack.c.l.b16 %v1034
          %v1082 = vunpack.c.l.b16 %v1035
          %v1083 = vunpack.c.l.b16 %v1036
          %v1084 = vunpack.c.l.b16 %v1037
          %v1085 = vunpack.c.l.b16 %v1038
          %v1086 = vunpack.c.l.b16 %v1039
          %v1087 = vunpack.c.l.b16 %v1040
          %v1088 = vunpack.c.l.b16 %v1041
          %v1089 = vunpack.c.l.b16 %v1042
          %v1090 = vunpack.c.l.b16 %v1043
          %v1091 = vunpack.c.l.b16 %v1044
          %v1092 = vunpack.c.l.b16 %v1045
          %v1093 = vunpack.c.l.b16 %v1046
          %v1094 = vunpack.c.l.b16 %v1047
          %v1095 = vunpack.c.l.b16 %v1048
          %v1096 = vunpack.c.l.b16 %v1049
          %v1097 = vpack.c.b16 %v1082, %v1081
          %v1098 = vpack.c.b16 %v1084, %v1083
          %v1099 = vpack.c.b16 %v1086, %v1085
          %v1100 = vpack.c.b16 %v1088, %v1087
          %v1101 = vpack.c.b16 %v1090, %v1089
          %v1102 = vpack.c.b16 %v1092, %v1091
          %v1103 = vpack.c.b16 %v1094, %v1093
          %v1104 = vpack.c.b16 %v1096, %v1095
          %1113 = vmatprep.subr.bf16.mxu0 0
          %1114 = vmatpush1.bf16.msra.mxu0 %v1104
          %1115 = vmatprep.subr.bf16.mxu0 0
          %1116 = vmatpush1.bf16.msra.mxu0 %v1103
          %1117 = vmatprep.subr.bf16.mxu0 0
          %1118 = vmatpush1.bf16.msra.mxu0 %v1102
          %1119 = vmatprep.subr.bf16.mxu0 0
          %1120 = vmatpush1.bf16.msra.mxu0 %v1101
          %1121 = vmatprep.subr.bf16.mxu0 0
          %1122 = vmatpush1.bf16.msra.mxu0 %v1100
          %1123 = vmatprep.subr.bf16.mxu0 0
          %1124 = vmatpush1.bf16.msra.mxu0 %v1099
          %1125 = vmatprep.subr.bf16.mxu0 0
          %1126 = vmatpush1.bf16.msra.mxu0 %v1098
          %1127 = vmatprep.subr.bf16.mxu0 0
          %1128 = vmatpush1.bf16.msra.mxu0 %v1097
          %1129 = vmatprep.subr.bf16.mxu0 0
          %1130 = vmatpush2.bf16.msra.mxu0 0
          %1131 = vmatprep.subr.bf16.mxu0 0
          %1132 = vmatpush2.bf16.msra.mxu0 0
          %1133 = vmatprep.subr.bf16.mxu0 0
          %1134 = vmatpush2.bf16.msra.mxu0 0
          %1135 = vmatprep.subr.bf16.mxu0 0
          %1136 = vmatpush2.bf16.msra.mxu0 0
          %1137 = vmatprep.subr.bf16.mxu0 0
          %1138 = vmatpush2.bf16.msra.mxu0 0
          %1139 = vmatprep.subr.bf16.mxu0 0
          %1140 = vmatpush2.bf16.msra.mxu0 0
          %1141 = vmatprep.subr.bf16.mxu0 0
          %1142 = vmatpush2.bf16.msra.mxu0 0
          %1143 = vmatprep.subr.bf16.mxu0 0
          %1144 = vmatpush2.bf16.msra.mxu0 0
          %1145 = vmatprep.mubr.bf16.mxu0 0
          %1146 = vmatmul.mubr.bf16.gmra.mxu0 %v1063
          %v1147 = vpop.f32.mrf.mxu0
          %v1148 = vadd.f32 %v1055, %v1147
          %v1149 = vpop.f32.mrf.mxu0
          %v1150 = vpop.f32.mrf.mxu0
          %v1151 = vpop.f32.mrf.mxu0
          %1152 = vdwg.mxu0
          %v1155 = vunpack.c.l.s4 1966171168
          %v1156 = vunpack.c.0.s8 %v1155
          %v1157 = vlaneseq
          %v1158 = vshrl.u32 %v1157, 7
          %v1159 = vsub.s32 %v1156, %v1158
          %v1160 = vrot.slane %v1148, %v1159
          %v1161 = vcombine.high %v1160, %v1160
          %v1163 = vunpack.c.l.s4 1966171168
          %v1164 = vunpack.c.0.s8 %v1163
          %v1165 = vlaneseq
          %v1166 = vshrl.u32 %v1165, 7
          %v1167 = vsub.s32 %v1164, %v1166
          %v1168 = vrot.slane %v1160, %v1167
          %v1170 = vunpack.c.l.s4 1966171168
          %v1171 = vunpack.c.0.s8 %v1170
          %v1172 = vlaneseq
          %v1173 = vshrl.u32 %v1172, 7
          %v1174 = vsub.s32 %v1171, %v1173
          %v1175 = vrot.slane %v1161, %v1174
          %1178 = vst [vmem:[#allocation14] sm:$0x1] %v1168
          %1179 = vst [vmem:[#allocation14 + $0x1] sm:$0x1] %v1175
        $region108: #{tpu_custom_call.1} parent=71 // pred_fallthru
          _
        // Predicated region
        $region109: #{tpu_custom_call.1} parent=71 // pred_check
          %p1180 = pneg %p367
        $region110: #{tpu_custom_call.1} parent=71 // pred_check_branch
          %1182 = sbr.rel (%p1180) target = $region112
        $region111: #{tpu_custom_call.1} parent=71 // pred_region
          %s1183 = smul.u32 2, %s33
          %s1185 = ssub.s32 32, 32
          %1186 = vsyncadd [#allocation6], %s1185
          %s1187 = smul.addr %s1183, 16
          %s1188 = scalar_lea.hbm %s13, %s1187
          %s1189 = sshll.u32 [#allocation14], 4
          %s1190 = int_to_ptr.vmem [resolvable:$true] %s1189
          %1195 = dma.vmem_to_hbm [thread:$0]  %s1190, 32, %s1188, [#allocation6], 16, 16, 1
        $region112: #{tpu_custom_call.1} parent=71 // pred_fallthru
          _
        // Predicated region
        $region113: #{tpu_custom_call.1} parent=71 // pred_check
          %p1196 = pneg %p367
        $region114: #{tpu_custom_call.1} parent=71 // pred_check_branch
          %1198 = sbr.rel (%p1196) target = $region116
        $region115: #{tpu_custom_call.1} parent=71 // pred_region
          %1199 = dma.done [#allocation6], 32
        $region116: #{tpu_custom_call.1} parent=71 // pred_fallthru
          _
      $region72: #{tpu_custom_call.1} parent=5 // pred_fallthru
        _
      %p1200 = scmp.le.s32.totalorder 2, %s23
      // Predicated region
      $region117: #{tpu_custom_call.1} parent=5 // pred_check
        %p1201 = pneg %p1200
      $region118: #{tpu_custom_call.1} parent=5 // pred_check_branch
        %1203 = sbr.rel (%p1201) target = $region120
      $region119: #{tpu_custom_call.1} parent=5 // pred_region
        %s1204 = ssub.s32 %s23, 2
      $region120: #{tpu_custom_call.1} parent=5 // pred_fallthru
        _
    $region6: #{tpu_custom_call.1} parent=1 // loop_footer
      %s27 = sadd.s32 1, %s23
    $region7: #{tpu_custom_call.1} parent=1 // loop_footer_branch
      %22 = sbr.rel target = $region3
    $region8: #{tpu_custom_call.1} parent=1 // loop_exit
      _
    %1205 = vsyncpa [#allocation5], 1
    %s1206 = scalar_lea.sflag [#allocation5], 1
    %1207 = vsyncpa %s1206, 1
    %1208 = vsyncpa [#allocation8], 1
    %1209 = vsyncpa [#allocation11], 1
    %1210 = vsyncpa [#allocation6], 1
    %s1211 = scalar_lea.sflag [#allocation6], 1
    %1212 = vsyncpa %s1211, 1

</llo_original>
